<compile_context>
chip_gen: v7x
topology: tpu7x:2x2x1
jax: 0.10.0
libtpu: 0.0.40
codegen_flags: <defaults>
</compile_context>

<pallas_src>
import functools

import jax
import jax.numpy as jnp
from jax.experimental import pallas as pl
from jax.experimental.pallas import tpu as pltpu  # noqa: F401  (TPU backend)

# ---------------- problem sizes (small, consistent with the module) ----------------
B = 2        # batch
T = 16       # sequence length
K = 8        # embedding size
HEADS = 8    # K == HEADS so the reference `.view(b, t, s*k)` is valid (S == 1)
S = K // HEADS
EPS = 1e-5   # nn.LayerNorm default eps


# ---------------------------------- Pallas kernel ----------------------------------
def transformer_block_kernel(
    x_ref,        # (B*T, K)   batch folded into sublanes
    wqkv_ref,     # (K, 3K)    [wq/sqrt(K) | wk | wv] fused projection weight
    wu_ref,       # (K, K)     unify-heads weight
    w1_ref,       # (K, 4K)    FF first weight
    bf1_ref,      # (1, 4K)    FF first bias
    w2_ref,       # (4K, K)    FF second weight
    vec_ref,      # (6, K)     rows: bu, g1, b1, bf2, g2, b2
    o_ref,        # (B*T, K)
    *, batch, seq, heads,
):
    k = x_ref.shape[-1]
    x = x_ref[...]                                             # (B*T, K) f32

    # small per-feature parameters: free static sublane slices of one packed operand
    bu  = vec_ref[0:1, :]
    g1  = vec_ref[1:2, :]
    b1  = vec_ref[2:3, :]
    bf2 = vec_ref[3:4, :]
    g2  = vec_ref[4:5, :]
    b2  = vec_ref[5:6, :]

    # ---- fused Q/K/V projection: a single MXU matmul (1/sqrt(K) pre-folded into Wq) ----
    qkv = jnp.dot(x, wqkv_ref[...], preferred_element_type=jnp.float32)  # (B*T, 3K)
    q_all = qkv[:, 0 * k:1 * k]                                # (B*T, K)  already scaled
    kT_all = qkv[:, 1 * k:2 * k].T                             # (K, B*T)  one XLU transpose
    vT_all = qkv[:, 2 * k:3 * k].T                             # (K, B*T)

    # ---- multi-head attention (head dim S == 1): all-VPU rank-1 outer products ----
    batch_outs = []
    for bi in range(batch):                                    # static, B == 2
        lo = bi * seq
        qb = q_all[lo:lo + seq, :]                             # (T, K)
        cols = []
        for h in range(heads):                                 # static, HEADS == 8
            krow = kT_all[h:h + 1, lo:lo + seq]                # (1, T)
            vrow = vT_all[h:h + 1, lo:lo + seq]                # (1, T)
            s = qb[:, h:h + 1] * krow                          # (T, T) outer product (VPU)
            s = s - jnp.max(s, axis=-1, keepdims=True)         # stabilised softmax over keys
            p = jnp.exp(s)
            # exact reciprocal keeps the 1e-4 check vs. the f32 reference;
            # approx=True is a free EUP upgrade if the tolerance allows it.
            p = p * pl.reciprocal(jnp.sum(p, axis=-1, keepdims=True))
            cols.append(jnp.sum(p * vrow, axis=-1, keepdims=True))   # (T, 1)
        batch_outs.append(jnp.concatenate(cols, axis=-1))            # (T, K)
    attn = jnp.concatenate(batch_outs, axis=0)                       # (B*T, K)

    # ---- unify heads (Linear with bias) ----
    u = jnp.dot(attn, wu_ref[...], preferred_element_type=jnp.float32) + bu

    # ---- residual + LayerNorm 1 (rsqrt -> EUP) ----
    r1 = u + x
    m1 = jnp.mean(r1, axis=-1, keepdims=True)
    c1 = r1 - m1
    var1 = jnp.mean(c1 * c1, axis=-1, keepdims=True)
    x1 = c1 * jax.lax.rsqrt(var1 + EPS) * g1 + b1

    # ---- feed-forward: Linear(K, 4K) -> ReLU -> Linear(4K, K) ----
    h1 = jnp.dot(x1, w1_ref[...], preferred_element_type=jnp.float32) + bf1_ref[...]
    h1 = jnp.maximum(h1, 0.0)
    ff = jnp.dot(h1, w2_ref[...], preferred_element_type=jnp.float32) + bf2

    # ---- residual + LayerNorm 2 ----
    r2 = ff + x1
    m2 = jnp.mean(r2, axis=-1, keepdims=True)
    c2 = r2 - m2
    var2 = jnp.mean(c2 * c2, axis=-1, keepdims=True)
    o_ref[...] = c2 * jax.lax.rsqrt(var2 + EPS) * g2 + b2


# ---------------------------------- host-side glue ----------------------------------
def pack_params(wq, wk, wv, wu, bu, g1, b1, w1, bf1, w2, bf2, g2, b2):
    """One-time host-side weight prep: fuse Q/K/V (with scale) and pack the (1,K) vectors."""
    scale = 1.0 / jnp.sqrt(jnp.float32(K))
    wqkv = jnp.concatenate([wq * scale, wk, wv], axis=1)        # (K, 3K)
    vecs = jnp.concatenate([bu, g1, b1, bf2, g2, b2], axis=0)   # (6, K)
    return (wqkv, wu, w1, bf1, w2, vecs)


def transformer_block(x, packed):
    """x: (B, T, K).  packed: (wqkv, wu, w1, bf1, w2, vecs)."""
    wqkv, wu, w1, bf1, w2, vecs = packed
    b, t, k = x.shape
    assert k == HEADS and k % HEADS == 0, "reference .view(b,t,s*k) requires K == HEADS"
    kernel = functools.partial(transformer_block_kernel, batch=b, seq=t, heads=HEADS)
    # Single invocation, no grid: every operand is a whole-array VMEM block.
    out2d = pl.pallas_call(
        kernel,
        out_shape=jax.ShapeDtypeStruct((b * t, k), jnp.float32),
    )(x.reshape(b * t, k), wqkv, wu, w1, bf1, w2, vecs)
    return out2d.reshape(b, t, k)


# -------------------------- pure-JAX reference (mirrors PyTorch) --------------------------
def _layernorm(x, gamma, beta):
    m = jnp.mean(x, axis=-1, keepdims=True)
    v = jnp.mean((x - m) ** 2, axis=-1, keepdims=True)
    return (x - m) / jnp.sqrt(v + EPS) * gamma.reshape(-1) + beta.reshape(-1)


def reference(x, raw):
    (wq, wk, wv, wu, bu, g1, b1, w1, bf1, w2, bf2, g2, b2) = raw
    b, t, k = x.shape
    h, s = HEADS, K // HEADS
    q = x @ wq
    ky = x @ wk
    v = x @ wv
    q = q.reshape(b, t, h, s).transpose(0, 2, 1, 3).reshape(b * h, t, s)
    ky = ky.reshape(b, t, h, s).transpose(0, 2, 1, 3).reshape(b * h, t, s)
    v = v.reshape(b, t, h, s).transpose(0, 2, 1, 3).reshape(b * h, t, s)
    dot = jnp.einsum("bts,bus->btu", q, ky) / jnp.sqrt(jnp.float32(k))
    dot = jax.nn.softmax(dot, axis=2)
    out = jnp.einsum("btu,bus->bts", dot, v).reshape(b, h, t, s)
    out = out.transpose(0, 2, 1, 3).reshape(b, t, s * k)  # valid because k == h
    attn = out @ wu + bu.reshape(-1)
    x1 = _layernorm(attn + x, g1, b1)
    ff = jax.nn.relu(x1 @ w1 + bf1.reshape(-1)) @ w2 + bf2.reshape(-1)
    return _layernorm(ff + x1, g2, b2)


# ------------------------------------- main -------------------------------------
if __name__ == "__main__":
    key = jax.random.PRNGKey(0)
    keys = jax.random.split(key, 16)

    def rnd(k_, shape, scale=0.2):
        return (scale * jax.random.normal(k_, shape)).astype(jnp.float32)

    x = rnd(keys[0], (B, T, K), scale=1.0)

    wq = rnd(keys[1], (K, K))             # (in, out): y = x @ W  (== PyTorch x @ W_pt.T)
    wk = rnd(keys[2], (K, K))
    wv = rnd(keys[3], (K, K))
    wu = rnd(keys[4], (K, K))
    bu = rnd(keys[5], (1, K))
    g1 = jnp.ones((1, K), jnp.float32)
    b1 = jnp.zeros((1, K), jnp.float32)
    w1 = rnd(keys[6], (K, 4 * K))
    bf1 = rnd(keys[7], (1, 4 * K))
    w2 = rnd(keys[8], (4 * K, K))
    bf2 = rnd(keys[9], (1, K))
    g2 = jnp.ones((1, K), jnp.float32)
    b2 = jnp.zeros((1, K), jnp.float32)

    raw = (wq, wk, wv, wu, bu, g1, b1, w1, bf1, w2, bf2, g2, b2)
    packed = pack_params(*raw)

    out = transformer_block(x, packed)
    out = jax.block_until_ready(out)

    ref = reference(x, raw)
    assert out.shape == (B, T, K)
    assert jnp.allclose(out, ref, rtol=1e-4, atol=1e-4), "mismatch vs pure-JAX reference"

    print("KERNEL_OK")
</pallas_src>

<mosaic_0001>
module attributes {stable_mosaic.version = 11 : i64} {
  func.func @transformer_block_kernel(%arg0: memref<32x8xf32, #tpu.memory_space<vmem>>, %arg1: memref<8x24xf32, #tpu.memory_space<vmem>>, %arg2: memref<8x8xf32, #tpu.memory_space<vmem>>, %arg3: memref<8x32xf32, #tpu.memory_space<vmem>>, %arg4: memref<1x32xf32, #tpu.memory_space<vmem>>, %arg5: memref<32x8xf32, #tpu.memory_space<vmem>>, %arg6: memref<6x8xf32, #tpu.memory_space<vmem>>, %arg7: memref<32x8xf32, #tpu.memory_space<vmem>>) attributes {dimension_semantics = [], scalar_prefetch = 0 : i64, scratch_operands = 0 : i64, tpu.core_type = #tpu.core_type<tc>} {
    %c0 = arith.constant 0 : index
    %c0_0 = arith.constant 0 : index
    %0 = vector.load %arg0[%c0, %c0_0] : memref<32x8xf32, #tpu.memory_space<vmem>>, vector<32x8xf32>
    %c0_1 = arith.constant 0 : index
    %c0_2 = arith.constant 0 : index
    %1 = vector.load %arg6[%c0_1, %c0_2] : memref<6x8xf32, #tpu.memory_space<vmem>>, vector<1x8xf32>
    %c1 = arith.constant 1 : index
    %c0_3 = arith.constant 0 : index
    %2 = vector.load %arg6[%c1, %c0_3] : memref<6x8xf32, #tpu.memory_space<vmem>>, vector<1x8xf32>
    %c2 = arith.constant 2 : index
    %c0_4 = arith.constant 0 : index
    %3 = vector.load %arg6[%c2, %c0_4] : memref<6x8xf32, #tpu.memory_space<vmem>>, vector<1x8xf32>
    %c3 = arith.constant 3 : index
    %c0_5 = arith.constant 0 : index
    %4 = vector.load %arg6[%c3, %c0_5] : memref<6x8xf32, #tpu.memory_space<vmem>>, vector<1x8xf32>
    %c4 = arith.constant 4 : index
    %c0_6 = arith.constant 0 : index
    %5 = vector.load %arg6[%c4, %c0_6] : memref<6x8xf32, #tpu.memory_space<vmem>>, vector<1x8xf32>
    %c5 = arith.constant 5 : index
    %c0_7 = arith.constant 0 : index
    %6 = vector.load %arg6[%c5, %c0_7] : memref<6x8xf32, #tpu.memory_space<vmem>>, vector<1x8xf32>
    %c0_8 = arith.constant 0 : index
    %c0_9 = arith.constant 0 : index
    %7 = vector.load %arg1[%c0_8, %c0_9] : memref<8x24xf32, #tpu.memory_space<vmem>>, vector<8x24xf32>
    %cst = arith.constant dense<0.000000e+00> : vector<32x24xf32>
    %8 = tpu.matmul %0, %7, %cst {dimension_numbers = #tpu.dot_dimension_numbers<[1], [0], [0], [1], [0, 0, 1, 1], [], []>} : vector<32x8xf32>, vector<8x24xf32>, vector<32x24xf32> -> vector<32x24xf32>
    %9 = vector.extract_strided_slice %8 {offsets = [0, 0], sizes = [32, 8], strides = [1, 1]} : vector<32x24xf32> to vector<32x8xf32>
    %10 = vector.extract_strided_slice %8 {offsets = [0, 8], sizes = [32, 8], strides = [1, 1]} : vector<32x24xf32> to vector<32x8xf32>
    %11 = tpu.transpose %10, [1, 0] : vector<32x8xf32> -> vector<8x32xf32>
    %12 = vector.extract_strided_slice %8 {offsets = [0, 16], sizes = [32, 8], strides = [1, 1]} : vector<32x24xf32> to vector<32x8xf32>
    %13 = tpu.transpose %12, [1, 0] : vector<32x8xf32> -> vector<8x32xf32>
    %14 = vector.extract_strided_slice %9 {offsets = [0, 0], sizes = [16, 8], strides = [1, 1]} : vector<32x8xf32> to vector<16x8xf32>
    %15 = vector.extract_strided_slice %11 {offsets = [0, 0], sizes = [1, 16], strides = [1, 1]} : vector<8x32xf32> to vector<1x16xf32>
    %16 = vector.extract_strided_slice %13 {offsets = [0, 0], sizes = [1, 16], strides = [1, 1]} : vector<8x32xf32> to vector<1x16xf32>
    %17 = vector.extract_strided_slice %14 {offsets = [0, 0], sizes = [16, 1], strides = [1, 1]} : vector<16x8xf32> to vector<16x1xf32>
    %18 = vector.broadcast %17 : vector<16x1xf32> to vector<16x16xf32>
    %19 = vector.broadcast %15 : vector<1x16xf32> to vector<16x16xf32>
    %20 = arith.mulf %18, %19 : vector<16x16xf32>
    %cst_10 = arith.constant dense<0xFF800000> : vector<16xf32>
    %21 = vector.multi_reduction <maximumf>, %20, %cst_10 [1] : vector<16x16xf32> to vector<16xf32>
    %22 = vector.shape_cast %21 : vector<16xf32> to vector<16x1xf32>
    %23 = vector.broadcast %22 : vector<16x1xf32> to vector<16x16xf32>
    %24 = arith.subf %20, %23 : vector<16x16xf32>
    %25 = math.exp %24 : vector<16x16xf32>
    %cst_11 = arith.constant dense<0.000000e+00> : vector<16xf32>
    %26 = vector.multi_reduction <add>, %25, %cst_11 [1] : vector<16x16xf32> to vector<16xf32>
    %27 = vector.shape_cast %26 : vector<16xf32> to vector<16x1xf32>
    %28 = tpu.reciprocal %27 : vector<16x1xf32> -> vector<16x1xf32>
    %29 = vector.broadcast %28 : vector<16x1xf32> to vector<16x16xf32>
    %30 = arith.mulf %25, %29 : vector<16x16xf32>
    %31 = vector.broadcast %16 : vector<1x16xf32> to vector<16x16xf32>
    %32 = arith.mulf %30, %31 : vector<16x16xf32>
    %cst_12 = arith.constant dense<0.000000e+00> : vector<16xf32>
    %33 = vector.multi_reduction <add>, %32, %cst_12 [1] : vector<16x16xf32> to vector<16xf32>
    %34 = vector.shape_cast %33 : vector<16xf32> to vector<16x1xf32>
    %35 = vector.extract_strided_slice %11 {offsets = [1, 0], sizes = [1, 16], strides = [1, 1]} : vector<8x32xf32> to vector<1x16xf32>
    %36 = vector.extract_strided_slice %13 {offsets = [1, 0], sizes = [1, 16], strides = [1, 1]} : vector<8x32xf32> to vector<1x16xf32>
    %37 = vector.extract_strided_slice %14 {offsets = [0, 1], sizes = [16, 1], strides = [1, 1]} : vector<16x8xf32> to vector<16x1xf32>
    %38 = vector.broadcast %37 : vector<16x1xf32> to vector<16x16xf32>
    %39 = vector.broadcast %35 : vector<1x16xf32> to vector<16x16xf32>
    %40 = arith.mulf %38, %39 : vector<16x16xf32>
    %cst_13 = arith.constant dense<0xFF800000> : vector<16xf32>
    %41 = vector.multi_reduction <maximumf>, %40, %cst_13 [1] : vector<16x16xf32> to vector<16xf32>
    %42 = vector.shape_cast %41 : vector<16xf32> to vector<16x1xf32>
    %43 = vector.broadcast %42 : vector<16x1xf32> to vector<16x16xf32>
    %44 = arith.subf %40, %43 : vector<16x16xf32>
    %45 = math.exp %44 : vector<16x16xf32>
    %cst_14 = arith.constant dense<0.000000e+00> : vector<16xf32>
    %46 = vector.multi_reduction <add>, %45, %cst_14 [1] : vector<16x16xf32> to vector<16xf32>
    %47 = vector.shape_cast %46 : vector<16xf32> to vector<16x1xf32>
    %48 = tpu.reciprocal %47 : vector<16x1xf32> -> vector<16x1xf32>
    %49 = vector.broadcast %48 : vector<16x1xf32> to vector<16x16xf32>
    %50 = arith.mulf %45, %49 : vector<16x16xf32>
    %51 = vector.broadcast %36 : vector<1x16xf32> to vector<16x16xf32>
    %52 = arith.mulf %50, %51 : vector<16x16xf32>
    %cst_15 = arith.constant dense<0.000000e+00> : vector<16xf32>
    %53 = vector.multi_reduction <add>, %52, %cst_15 [1] : vector<16x16xf32> to vector<16xf32>
    %54 = vector.shape_cast %53 : vector<16xf32> to vector<16x1xf32>
    %55 = vector.extract_strided_slice %11 {offsets = [2, 0], sizes = [1, 16], strides = [1, 1]} : vector<8x32xf32> to vector<1x16xf32>
    %56 = vector.extract_strided_slice %13 {offsets = [2, 0], sizes = [1, 16], strides = [1, 1]} : vector<8x32xf32> to vector<1x16xf32>
    %57 = vector.extract_strided_slice %14 {offsets = [0, 2], sizes = [16, 1], strides = [1, 1]} : vector<16x8xf32> to vector<16x1xf32>
    %58 = vector.broadcast %57 : vector<16x1xf32> to vector<16x16xf32>
    %59 = vector.broadcast %55 : vector<1x16xf32> to vector<16x16xf32>
    %60 = arith.mulf %58, %59 : vector<16x16xf32>
    %cst_16 = arith.constant dense<0xFF800000> : vector<16xf32>
    %61 = vector.multi_reduction <maximumf>, %60, %cst_16 [1] : vector<16x16xf32> to vector<16xf32>
    %62 = vector.shape_cast %61 : vector<16xf32> to vector<16x1xf32>
    %63 = vector.broadcast %62 : vector<16x1xf32> to vector<16x16xf32>
    %64 = arith.subf %60, %63 : vector<16x16xf32>
    %65 = math.exp %64 : vector<16x16xf32>
    %cst_17 = arith.constant dense<0.000000e+00> : vector<16xf32>
    %66 = vector.multi_reduction <add>, %65, %cst_17 [1] : vector<16x16xf32> to vector<16xf32>
    %67 = vector.shape_cast %66 : vector<16xf32> to vector<16x1xf32>
    %68 = tpu.reciprocal %67 : vector<16x1xf32> -> vector<16x1xf32>
    %69 = vector.broadcast %68 : vector<16x1xf32> to vector<16x16xf32>
    %70 = arith.mulf %65, %69 : vector<16x16xf32>
    %71 = vector.broadcast %56 : vector<1x16xf32> to vector<16x16xf32>
    %72 = arith.mulf %70, %71 : vector<16x16xf32>
    %cst_18 = arith.constant dense<0.000000e+00> : vector<16xf32>
    %73 = vector.multi_reduction <add>, %72, %cst_18 [1] : vector<16x16xf32> to vector<16xf32>
    %74 = vector.shape_cast %73 : vector<16xf32> to vector<16x1xf32>
    %75 = vector.extract_strided_slice %11 {offsets = [3, 0], sizes = [1, 16], strides = [1, 1]} : vector<8x32xf32> to vector<1x16xf32>
    %76 = vector.extract_strided_slice %13 {offsets = [3, 0], sizes = [1, 16], strides = [1, 1]} : vector<8x32xf32> to vector<1x16xf32>
    %77 = vector.extract_strided_slice %14 {offsets = [0, 3], sizes = [16, 1], strides = [1, 1]} : vector<16x8xf32> to vector<16x1xf32>
    %78 = vector.broadcast %77 : vector<16x1xf32> to vector<16x16xf32>
    %79 = vector.broadcast %75 : vector<1x16xf32> to vector<16x16xf32>
    %80 = arith.mulf %78, %79 : vector<16x16xf32>
    %cst_19 = arith.constant dense<0xFF800000> : vector<16xf32>
    %81 = vector.multi_reduction <maximumf>, %80, %cst_19 [1] : vector<16x16xf32> to vector<16xf32>
    %82 = vector.shape_cast %81 : vector<16xf32> to vector<16x1xf32>
    %83 = vector.broadcast %82 : vector<16x1xf32> to vector<16x16xf32>
    %84 = arith.subf %80, %83 : vector<16x16xf32>
    %85 = math.exp %84 : vector<16x16xf32>
    %cst_20 = arith.constant dense<0.000000e+00> : vector<16xf32>
    %86 = vector.multi_reduction <add>, %85, %cst_20 [1] : vector<16x16xf32> to vector<16xf32>
    %87 = vector.shape_cast %86 : vector<16xf32> to vector<16x1xf32>
    %88 = tpu.reciprocal %87 : vector<16x1xf32> -> vector<16x1xf32>
    %89 = vector.broadcast %88 : vector<16x1xf32> to vector<16x16xf32>
    %90 = arith.mulf %85, %89 : vector<16x16xf32>
    %91 = vector.broadcast %76 : vector<1x16xf32> to vector<16x16xf32>
    %92 = arith.mulf %90, %91 : vector<16x16xf32>
    %cst_21 = arith.constant dense<0.000000e+00> : vector<16xf32>
    %93 = vector.multi_reduction <add>, %92, %cst_21 [1] : vector<16x16xf32> to vector<16xf32>
    %94 = vector.shape_cast %93 : vector<16xf32> to vector<16x1xf32>
    %95 = vector.extract_strided_slice %11 {offsets = [4, 0], sizes = [1, 16], strides = [1, 1]} : vector<8x32xf32> to vector<1x16xf32>
    %96 = vector.extract_strided_slice %13 {offsets = [4, 0], sizes = [1, 16], strides = [1, 1]} : vector<8x32xf32> to vector<1x16xf32>
    %97 = vector.extract_strided_slice %14 {offsets = [0, 4], sizes = [16, 1], strides = [1, 1]} : vector<16x8xf32> to vector<16x1xf32>
    %98 = vector.broadcast %97 : vector<16x1xf32> to vector<16x16xf32>
    %99 = vector.broadcast %95 : vector<1x16xf32> to vector<16x16xf32>
    %100 = arith.mulf %98, %99 : vector<16x16xf32>
    %cst_22 = arith.constant dense<0xFF800000> : vector<16xf32>
    %101 = vector.multi_reduction <maximumf>, %100, %cst_22 [1] : vector<16x16xf32> to vector<16xf32>
    %102 = vector.shape_cast %101 : vector<16xf32> to vector<16x1xf32>
    %103 = vector.broadcast %102 : vector<16x1xf32> to vector<16x16xf32>
    %104 = arith.subf %100, %103 : vector<16x16xf32>
    %105 = math.exp %104 : vector<16x16xf32>
    %cst_23 = arith.constant dense<0.000000e+00> : vector<16xf32>
    %106 = vector.multi_reduction <add>, %105, %cst_23 [1] : vector<16x16xf32> to vector<16xf32>
    %107 = vector.shape_cast %106 : vector<16xf32> to vector<16x1xf32>
    %108 = tpu.reciprocal %107 : vector<16x1xf32> -> vector<16x1xf32>
    %109 = vector.broadcast %108 : vector<16x1xf32> to vector<16x16xf32>
    %110 = arith.mulf %105, %109 : vector<16x16xf32>
    %111 = vector.broadcast %96 : vector<1x16xf32> to vector<16x16xf32>
    %112 = arith.mulf %110, %111 : vector<16x16xf32>
    %cst_24 = arith.constant dense<0.000000e+00> : vector<16xf32>
    %113 = vector.multi_reduction <add>, %112, %cst_24 [1] : vector<16x16xf32> to vector<16xf32>
    %114 = vector.shape_cast %113 : vector<16xf32> to vector<16x1xf32>
    %115 = vector.extract_strided_slice %11 {offsets = [5, 0], sizes = [1, 16], strides = [1, 1]} : vector<8x32xf32> to vector<1x16xf32>
    %116 = vector.extract_strided_slice %13 {offsets = [5, 0], sizes = [1, 16], strides = [1, 1]} : vector<8x32xf32> to vector<1x16xf32>
    %117 = vector.extract_strided_slice %14 {offsets = [0, 5], sizes = [16, 1], strides = [1, 1]} : vector<16x8xf32> to vector<16x1xf32>
    %118 = vector.broadcast %117 : vector<16x1xf32> to vector<16x16xf32>
    %119 = vector.broadcast %115 : vector<1x16xf32> to vector<16x16xf32>
    %120 = arith.mulf %118, %119 : vector<16x16xf32>
    %cst_25 = arith.constant dense<0xFF800000> : vector<16xf32>
    %121 = vector.multi_reduction <maximumf>, %120, %cst_25 [1] : vector<16x16xf32> to vector<16xf32>
    %122 = vector.shape_cast %121 : vector<16xf32> to vector<16x1xf32>
    %123 = vector.broadcast %122 : vector<16x1xf32> to vector<16x16xf32>
    %124 = arith.subf %120, %123 : vector<16x16xf32>
    %125 = math.exp %124 : vector<16x16xf32>
    %cst_26 = arith.constant dense<0.000000e+00> : vector<16xf32>
    %126 = vector.multi_reduction <add>, %125, %cst_26 [1] : vector<16x16xf32> to vector<16xf32>
    %127 = vector.shape_cast %126 : vector<16xf32> to vector<16x1xf32>
    %128 = tpu.reciprocal %127 : vector<16x1xf32> -> vector<16x1xf32>
    %129 = vector.broadcast %128 : vector<16x1xf32> to vector<16x16xf32>
    %130 = arith.mulf %125, %129 : vector<16x16xf32>
    %131 = vector.broadcast %116 : vector<1x16xf32> to vector<16x16xf32>
    %132 = arith.mulf %130, %131 : vector<16x16xf32>
    %cst_27 = arith.constant dense<0.000000e+00> : vector<16xf32>
    %133 = vector.multi_reduction <add>, %132, %cst_27 [1] : vector<16x16xf32> to vector<16xf32>
    %134 = vector.shape_cast %133 : vector<16xf32> to vector<16x1xf32>
    %135 = vector.extract_strided_slice %11 {offsets = [6, 0], sizes = [1, 16], strides = [1, 1]} : vector<8x32xf32> to vector<1x16xf32>
    %136 = vector.extract_strided_slice %13 {offsets = [6, 0], sizes = [1, 16], strides = [1, 1]} : vector<8x32xf32> to vector<1x16xf32>
    %137 = vector.extract_strided_slice %14 {offsets = [0, 6], sizes = [16, 1], strides = [1, 1]} : vector<16x8xf32> to vector<16x1xf32>
    %138 = vector.broadcast %137 : vector<16x1xf32> to vector<16x16xf32>
    %139 = vector.broadcast %135 : vector<1x16xf32> to vector<16x16xf32>
    %140 = arith.mulf %138, %139 : vector<16x16xf32>
    %cst_28 = arith.constant dense<0xFF800000> : vector<16xf32>
    %141 = vector.multi_reduction <maximumf>, %140, %cst_28 [1] : vector<16x16xf32> to vector<16xf32>
    %142 = vector.shape_cast %141 : vector<16xf32> to vector<16x1xf32>
    %143 = vector.broadcast %142 : vector<16x1xf32> to vector<16x16xf32>
    %144 = arith.subf %140, %143 : vector<16x16xf32>
    %145 = math.exp %144 : vector<16x16xf32>
    %cst_29 = arith.constant dense<0.000000e+00> : vector<16xf32>
    %146 = vector.multi_reduction <add>, %145, %cst_29 [1] : vector<16x16xf32> to vector<16xf32>
    %147 = vector.shape_cast %146 : vector<16xf32> to vector<16x1xf32>
    %148 = tpu.reciprocal %147 : vector<16x1xf32> -> vector<16x1xf32>
    %149 = vector.broadcast %148 : vector<16x1xf32> to vector<16x16xf32>
    %150 = arith.mulf %145, %149 : vector<16x16xf32>
    %151 = vector.broadcast %136 : vector<1x16xf32> to vector<16x16xf32>
    %152 = arith.mulf %150, %151 : vector<16x16xf32>
    %cst_30 = arith.constant dense<0.000000e+00> : vector<16xf32>
    %153 = vector.multi_reduction <add>, %152, %cst_30 [1] : vector<16x16xf32> to vector<16xf32>
    %154 = vector.shape_cast %153 : vector<16xf32> to vector<16x1xf32>
    %155 = vector.extract_strided_slice %11 {offsets = [7, 0], sizes = [1, 16], strides = [1, 1]} : vector<8x32xf32> to vector<1x16xf32>
    %156 = vector.extract_strided_slice %13 {offsets = [7, 0], sizes = [1, 16], strides = [1, 1]} : vector<8x32xf32> to vector<1x16xf32>
    %157 = vector.extract_strided_slice %14 {offsets = [0, 7], sizes = [16, 1], strides = [1, 1]} : vector<16x8xf32> to vector<16x1xf32>
    %158 = vector.broadcast %157 : vector<16x1xf32> to vector<16x16xf32>
    %159 = vector.broadcast %155 : vector<1x16xf32> to vector<16x16xf32>
    %160 = arith.mulf %158, %159 : vector<16x16xf32>
    %cst_31 = arith.constant dense<0xFF800000> : vector<16xf32>
    %161 = vector.multi_reduction <maximumf>, %160, %cst_31 [1] : vector<16x16xf32> to vector<16xf32>
    %162 = vector.shape_cast %161 : vector<16xf32> to vector<16x1xf32>
    %163 = vector.broadcast %162 : vector<16x1xf32> to vector<16x16xf32>
    %164 = arith.subf %160, %163 : vector<16x16xf32>
    %165 = math.exp %164 : vector<16x16xf32>
    %cst_32 = arith.constant dense<0.000000e+00> : vector<16xf32>
    %166 = vector.multi_reduction <add>, %165, %cst_32 [1] : vector<16x16xf32> to vector<16xf32>
    %167 = vector.shape_cast %166 : vector<16xf32> to vector<16x1xf32>
    %168 = tpu.reciprocal %167 : vector<16x1xf32> -> vector<16x1xf32>
    %169 = vector.broadcast %168 : vector<16x1xf32> to vector<16x16xf32>
    %170 = arith.mulf %165, %169 : vector<16x16xf32>
    %171 = vector.broadcast %156 : vector<1x16xf32> to vector<16x16xf32>
    %172 = arith.mulf %170, %171 : vector<16x16xf32>
    %cst_33 = arith.constant dense<0.000000e+00> : vector<16xf32>
    %173 = vector.multi_reduction <add>, %172, %cst_33 [1] : vector<16x16xf32> to vector<16xf32>
    %174 = vector.shape_cast %173 : vector<16xf32> to vector<16x1xf32>
    %175 = tpu.concatenate %34, %54, %74, %94, %114, %134, %154, %174 in 1 : vector<16x1xf32>, vector<16x1xf32>, vector<16x1xf32>, vector<16x1xf32>, vector<16x1xf32>, vector<16x1xf32>, vector<16x1xf32>, vector<16x1xf32> -> vector<16x8xf32>
    %176 = vector.extract_strided_slice %9 {offsets = [16, 0], sizes = [16, 8], strides = [1, 1]} : vector<32x8xf32> to vector<16x8xf32>
    %177 = vector.extract_strided_slice %11 {offsets = [0, 16], sizes = [1, 16], strides = [1, 1]} : vector<8x32xf32> to vector<1x16xf32>
    %178 = vector.extract_strided_slice %13 {offsets = [0, 16], sizes = [1, 16], strides = [1, 1]} : vector<8x32xf32> to vector<1x16xf32>
    %179 = vector.extract_strided_slice %176 {offsets = [0, 0], sizes = [16, 1], strides = [1, 1]} : vector<16x8xf32> to vector<16x1xf32>
    %180 = vector.broadcast %179 : vector<16x1xf32> to vector<16x16xf32>
    %181 = vector.broadcast %177 : vector<1x16xf32> to vector<16x16xf32>
    %182 = arith.mulf %180, %181 : vector<16x16xf32>
    %cst_34 = arith.constant dense<0xFF800000> : vector<16xf32>
    %183 = vector.multi_reduction <maximumf>, %182, %cst_34 [1] : vector<16x16xf32> to vector<16xf32>
    %184 = vector.shape_cast %183 : vector<16xf32> to vector<16x1xf32>
    %185 = vector.broadcast %184 : vector<16x1xf32> to vector<16x16xf32>
    %186 = arith.subf %182, %185 : vector<16x16xf32>
    %187 = math.exp %186 : vector<16x16xf32>
    %cst_35 = arith.constant dense<0.000000e+00> : vector<16xf32>
    %188 = vector.multi_reduction <add>, %187, %cst_35 [1] : vector<16x16xf32> to vector<16xf32>
    %189 = vector.shape_cast %188 : vector<16xf32> to vector<16x1xf32>
    %190 = tpu.reciprocal %189 : vector<16x1xf32> -> vector<16x1xf32>
    %191 = vector.broadcast %190 : vector<16x1xf32> to vector<16x16xf32>
    %192 = arith.mulf %187, %191 : vector<16x16xf32>
    %193 = vector.broadcast %178 : vector<1x16xf32> to vector<16x16xf32>
    %194 = arith.mulf %192, %193 : vector<16x16xf32>
    %cst_36 = arith.constant dense<0.000000e+00> : vector<16xf32>
    %195 = vector.multi_reduction <add>, %194, %cst_36 [1] : vector<16x16xf32> to vector<16xf32>
    %196 = vector.shape_cast %195 : vector<16xf32> to vector<16x1xf32>
    %197 = vector.extract_strided_slice %11 {offsets = [1, 16], sizes = [1, 16], strides = [1, 1]} : vector<8x32xf32> to vector<1x16xf32>
    %198 = vector.extract_strided_slice %13 {offsets = [1, 16], sizes = [1, 16], strides = [1, 1]} : vector<8x32xf32> to vector<1x16xf32>
    %199 = vector.extract_strided_slice %176 {offsets = [0, 1], sizes = [16, 1], strides = [1, 1]} : vector<16x8xf32> to vector<16x1xf32>
    %200 = vector.broadcast %199 : vector<16x1xf32> to vector<16x16xf32>
    %201 = vector.broadcast %197 : vector<1x16xf32> to vector<16x16xf32>
    %202 = arith.mulf %200, %201 : vector<16x16xf32>
    %cst_37 = arith.constant dense<0xFF800000> : vector<16xf32>
    %203 = vector.multi_reduction <maximumf>, %202, %cst_37 [1] : vector<16x16xf32> to vector<16xf32>
    %204 = vector.shape_cast %203 : vector<16xf32> to vector<16x1xf32>
    %205 = vector.broadcast %204 : vector<16x1xf32> to vector<16x16xf32>
    %206 = arith.subf %202, %205 : vector<16x16xf32>
    %207 = math.exp %206 : vector<16x16xf32>
    %cst_38 = arith.constant dense<0.000000e+00> : vector<16xf32>
    %208 = vector.multi_reduction <add>, %207, %cst_38 [1] : vector<16x16xf32> to vector<16xf32>
    %209 = vector.shape_cast %208 : vector<16xf32> to vector<16x1xf32>
    %210 = tpu.reciprocal %209 : vector<16x1xf32> -> vector<16x1xf32>
    %211 = vector.broadcast %210 : vector<16x1xf32> to vector<16x16xf32>
    %212 = arith.mulf %207, %211 : vector<16x16xf32>
    %213 = vector.broadcast %198 : vector<1x16xf32> to vector<16x16xf32>
    %214 = arith.mulf %212, %213 : vector<16x16xf32>
    %cst_39 = arith.constant dense<0.000000e+00> : vector<16xf32>
    %215 = vector.multi_reduction <add>, %214, %cst_39 [1] : vector<16x16xf32> to vector<16xf32>
    %216 = vector.shape_cast %215 : vector<16xf32> to vector<16x1xf32>
    %217 = vector.extract_strided_slice %11 {offsets = [2, 16], sizes = [1, 16], strides = [1, 1]} : vector<8x32xf32> to vector<1x16xf32>
    %218 = vector.extract_strided_slice %13 {offsets = [2, 16], sizes = [1, 16], strides = [1, 1]} : vector<8x32xf32> to vector<1x16xf32>
    %219 = vector.extract_strided_slice %176 {offsets = [0, 2], sizes = [16, 1], strides = [1, 1]} : vector<16x8xf32> to vector<16x1xf32>
    %220 = vector.broadcast %219 : vector<16x1xf32> to vector<16x16xf32>
    %221 = vector.broadcast %217 : vector<1x16xf32> to vector<16x16xf32>
    %222 = arith.mulf %220, %221 : vector<16x16xf32>
    %cst_40 = arith.constant dense<0xFF800000> : vector<16xf32>
    %223 = vector.multi_reduction <maximumf>, %222, %cst_40 [1] : vector<16x16xf32> to vector<16xf32>
    %224 = vector.shape_cast %223 : vector<16xf32> to vector<16x1xf32>
    %225 = vector.broadcast %224 : vector<16x1xf32> to vector<16x16xf32>
    %226 = arith.subf %222, %225 : vector<16x16xf32>
    %227 = math.exp %226 : vector<16x16xf32>
    %cst_41 = arith.constant dense<0.000000e+00> : vector<16xf32>
    %228 = vector.multi_reduction <add>, %227, %cst_41 [1] : vector<16x16xf32> to vector<16xf32>
    %229 = vector.shape_cast %228 : vector<16xf32> to vector<16x1xf32>
    %230 = tpu.reciprocal %229 : vector<16x1xf32> -> vector<16x1xf32>
    %231 = vector.broadcast %230 : vector<16x1xf32> to vector<16x16xf32>
    %232 = arith.mulf %227, %231 : vector<16x16xf32>
    %233 = vector.broadcast %218 : vector<1x16xf32> to vector<16x16xf32>
    %234 = arith.mulf %232, %233 : vector<16x16xf32>
    %cst_42 = arith.constant dense<0.000000e+00> : vector<16xf32>
    %235 = vector.multi_reduction <add>, %234, %cst_42 [1] : vector<16x16xf32> to vector<16xf32>
    %236 = vector.shape_cast %235 : vector<16xf32> to vector<16x1xf32>
    %237 = vector.extract_strided_slice %11 {offsets = [3, 16], sizes = [1, 16], strides = [1, 1]} : vector<8x32xf32> to vector<1x16xf32>
    %238 = vector.extract_strided_slice %13 {offsets = [3, 16], sizes = [1, 16], strides = [1, 1]} : vector<8x32xf32> to vector<1x16xf32>
    %239 = vector.extract_strided_slice %176 {offsets = [0, 3], sizes = [16, 1], strides = [1, 1]} : vector<16x8xf32> to vector<16x1xf32>
    %240 = vector.broadcast %239 : vector<16x1xf32> to vector<16x16xf32>
    %241 = vector.broadcast %237 : vector<1x16xf32> to vector<16x16xf32>
    %242 = arith.mulf %240, %241 : vector<16x16xf32>
    %cst_43 = arith.constant dense<0xFF800000> : vector<16xf32>
    %243 = vector.multi_reduction <maximumf>, %242, %cst_43 [1] : vector<16x16xf32> to vector<16xf32>
    %244 = vector.shape_cast %243 : vector<16xf32> to vector<16x1xf32>
    %245 = vector.broadcast %244 : vector<16x1xf32> to vector<16x16xf32>
    %246 = arith.subf %242, %245 : vector<16x16xf32>
    %247 = math.exp %246 : vector<16x16xf32>
    %cst_44 = arith.constant dense<0.000000e+00> : vector<16xf32>
    %248 = vector.multi_reduction <add>, %247, %cst_44 [1] : vector<16x16xf32> to vector<16xf32>
    %249 = vector.shape_cast %248 : vector<16xf32> to vector<16x1xf32>
    %250 = tpu.reciprocal %249 : vector<16x1xf32> -> vector<16x1xf32>
    %251 = vector.broadcast %250 : vector<16x1xf32> to vector<16x16xf32>
    %252 = arith.mulf %247, %251 : vector<16x16xf32>
    %253 = vector.broadcast %238 : vector<1x16xf32> to vector<16x16xf32>
    %254 = arith.mulf %252, %253 : vector<16x16xf32>
    %cst_45 = arith.constant dense<0.000000e+00> : vector<16xf32>
    %255 = vector.multi_reduction <add>, %254, %cst_45 [1] : vector<16x16xf32> to vector<16xf32>
    %256 = vector.shape_cast %255 : vector<16xf32> to vector<16x1xf32>
    %257 = vector.extract_strided_slice %11 {offsets = [4, 16], sizes = [1, 16], strides = [1, 1]} : vector<8x32xf32> to vector<1x16xf32>
    %258 = vector.extract_strided_slice %13 {offsets = [4, 16], sizes = [1, 16], strides = [1, 1]} : vector<8x32xf32> to vector<1x16xf32>
    %259 = vector.extract_strided_slice %176 {offsets = [0, 4], sizes = [16, 1], strides = [1, 1]} : vector<16x8xf32> to vector<16x1xf32>
    %260 = vector.broadcast %259 : vector<16x1xf32> to vector<16x16xf32>
    %261 = vector.broadcast %257 : vector<1x16xf32> to vector<16x16xf32>
    %262 = arith.mulf %260, %261 : vector<16x16xf32>
    %cst_46 = arith.constant dense<0xFF800000> : vector<16xf32>
    %263 = vector.multi_reduction <maximumf>, %262, %cst_46 [1] : vector<16x16xf32> to vector<16xf32>
    %264 = vector.shape_cast %263 : vector<16xf32> to vector<16x1xf32>
    %265 = vector.broadcast %264 : vector<16x1xf32> to vector<16x16xf32>
    %266 = arith.subf %262, %265 : vector<16x16xf32>
    %267 = math.exp %266 : vector<16x16xf32>
    %cst_47 = arith.constant dense<0.000000e+00> : vector<16xf32>
    %268 = vector.multi_reduction <add>, %267, %cst_47 [1] : vector<16x16xf32> to vector<16xf32>
    %269 = vector.shape_cast %268 : vector<16xf32> to vector<16x1xf32>
    %270 = tpu.reciprocal %269 : vector<16x1xf32> -> vector<16x1xf32>
    %271 = vector.broadcast %270 : vector<16x1xf32> to vector<16x16xf32>
    %272 = arith.mulf %267, %271 : vector<16x16xf32>
    %273 = vector.broadcast %258 : vector<1x16xf32> to vector<16x16xf32>
    %274 = arith.mulf %272, %273 : vector<16x16xf32>
    %cst_48 = arith.constant dense<0.000000e+00> : vector<16xf32>
    %275 = vector.multi_reduction <add>, %274, %cst_48 [1] : vector<16x16xf32> to vector<16xf32>
    %276 = vector.shape_cast %275 : vector<16xf32> to vector<16x1xf32>
    %277 = vector.extract_strided_slice %11 {offsets = [5, 16], sizes = [1, 16], strides = [1, 1]} : vector<8x32xf32> to vector<1x16xf32>
    %278 = vector.extract_strided_slice %13 {offsets = [5, 16], sizes = [1, 16], strides = [1, 1]} : vector<8x32xf32> to vector<1x16xf32>
    %279 = vector.extract_strided_slice %176 {offsets = [0, 5], sizes = [16, 1], strides = [1, 1]} : vector<16x8xf32> to vector<16x1xf32>
    %280 = vector.broadcast %279 : vector<16x1xf32> to vector<16x16xf32>
    %281 = vector.broadcast %277 : vector<1x16xf32> to vector<16x16xf32>
    %282 = arith.mulf %280, %281 : vector<16x16xf32>
    %cst_49 = arith.constant dense<0xFF800000> : vector<16xf32>
    %283 = vector.multi_reduction <maximumf>, %282, %cst_49 [1] : vector<16x16xf32> to vector<16xf32>
    %284 = vector.shape_cast %283 : vector<16xf32> to vector<16x1xf32>
    %285 = vector.broadcast %284 : vector<16x1xf32> to vector<16x16xf32>
    %286 = arith.subf %282, %285 : vector<16x16xf32>
    %287 = math.exp %286 : vector<16x16xf32>
    %cst_50 = arith.constant dense<0.000000e+00> : vector<16xf32>
    %288 = vector.multi_reduction <add>, %287, %cst_50 [1] : vector<16x16xf32> to vector<16xf32>
    %289 = vector.shape_cast %288 : vector<16xf32> to vector<16x1xf32>
    %290 = tpu.reciprocal %289 : vector<16x1xf32> -> vector<16x1xf32>
    %291 = vector.broadcast %290 : vector<16x1xf32> to vector<16x16xf32>
    %292 = arith.mulf %287, %291 : vector<16x16xf32>
    %293 = vector.broadcast %278 : vector<1x16xf32> to vector<16x16xf32>
    %294 = arith.mulf %292, %293 : vector<16x16xf32>
    %cst_51 = arith.constant dense<0.000000e+00> : vector<16xf32>
    %295 = vector.multi_reduction <add>, %294, %cst_51 [1] : vector<16x16xf32> to vector<16xf32>
    %296 = vector.shape_cast %295 : vector<16xf32> to vector<16x1xf32>
    %297 = vector.extract_strided_slice %11 {offsets = [6, 16], sizes = [1, 16], strides = [1, 1]} : vector<8x32xf32> to vector<1x16xf32>
    %298 = vector.extract_strided_slice %13 {offsets = [6, 16], sizes = [1, 16], strides = [1, 1]} : vector<8x32xf32> to vector<1x16xf32>
    %299 = vector.extract_strided_slice %176 {offsets = [0, 6], sizes = [16, 1], strides = [1, 1]} : vector<16x8xf32> to vector<16x1xf32>
    %300 = vector.broadcast %299 : vector<16x1xf32> to vector<16x16xf32>
    %301 = vector.broadcast %297 : vector<1x16xf32> to vector<16x16xf32>
    %302 = arith.mulf %300, %301 : vector<16x16xf32>
    %cst_52 = arith.constant dense<0xFF800000> : vector<16xf32>
    %303 = vector.multi_reduction <maximumf>, %302, %cst_52 [1] : vector<16x16xf32> to vector<16xf32>
    %304 = vector.shape_cast %303 : vector<16xf32> to vector<16x1xf32>
    %305 = vector.broadcast %304 : vector<16x1xf32> to vector<16x16xf32>
    %306 = arith.subf %302, %305 : vector<16x16xf32>
    %307 = math.exp %306 : vector<16x16xf32>
    %cst_53 = arith.constant dense<0.000000e+00> : vector<16xf32>
    %308 = vector.multi_reduction <add>, %307, %cst_53 [1] : vector<16x16xf32> to vector<16xf32>
    %309 = vector.shape_cast %308 : vector<16xf32> to vector<16x1xf32>
    %310 = tpu.reciprocal %309 : vector<16x1xf32> -> vector<16x1xf32>
    %311 = vector.broadcast %310 : vector<16x1xf32> to vector<16x16xf32>
    %312 = arith.mulf %307, %311 : vector<16x16xf32>
    %313 = vector.broadcast %298 : vector<1x16xf32> to vector<16x16xf32>
    %314 = arith.mulf %312, %313 : vector<16x16xf32>
    %cst_54 = arith.constant dense<0.000000e+00> : vector<16xf32>
    %315 = vector.multi_reduction <add>, %314, %cst_54 [1] : vector<16x16xf32> to vector<16xf32>
    %316 = vector.shape_cast %315 : vector<16xf32> to vector<16x1xf32>
    %317 = vector.extract_strided_slice %11 {offsets = [7, 16], sizes = [1, 16], strides = [1, 1]} : vector<8x32xf32> to vector<1x16xf32>
    %318 = vector.extract_strided_slice %13 {offsets = [7, 16], sizes = [1, 16], strides = [1, 1]} : vector<8x32xf32> to vector<1x16xf32>
    %319 = vector.extract_strided_slice %176 {offsets = [0, 7], sizes = [16, 1], strides = [1, 1]} : vector<16x8xf32> to vector<16x1xf32>
    %320 = vector.broadcast %319 : vector<16x1xf32> to vector<16x16xf32>
    %321 = vector.broadcast %317 : vector<1x16xf32> to vector<16x16xf32>
    %322 = arith.mulf %320, %321 : vector<16x16xf32>
    %cst_55 = arith.constant dense<0xFF800000> : vector<16xf32>
    %323 = vector.multi_reduction <maximumf>, %322, %cst_55 [1] : vector<16x16xf32> to vector<16xf32>
    %324 = vector.shape_cast %323 : vector<16xf32> to vector<16x1xf32>
    %325 = vector.broadcast %324 : vector<16x1xf32> to vector<16x16xf32>
    %326 = arith.subf %322, %325 : vector<16x16xf32>
    %327 = math.exp %326 : vector<16x16xf32>
    %cst_56 = arith.constant dense<0.000000e+00> : vector<16xf32>
    %328 = vector.multi_reduction <add>, %327, %cst_56 [1] : vector<16x16xf32> to vector<16xf32>
    %329 = vector.shape_cast %328 : vector<16xf32> to vector<16x1xf32>
    %330 = tpu.reciprocal %329 : vector<16x1xf32> -> vector<16x1xf32>
    %331 = vector.broadcast %330 : vector<16x1xf32> to vector<16x16xf32>
    %332 = arith.mulf %327, %331 : vector<16x16xf32>
    %333 = vector.broadcast %318 : vector<1x16xf32> to vector<16x16xf32>
    %334 = arith.mulf %332, %333 : vector<16x16xf32>
    %cst_57 = arith.constant dense<0.000000e+00> : vector<16xf32>
    %335 = vector.multi_reduction <add>, %334, %cst_57 [1] : vector<16x16xf32> to vector<16xf32>
    %336 = vector.shape_cast %335 : vector<16xf32> to vector<16x1xf32>
    %337 = tpu.concatenate %196, %216, %236, %256, %276, %296, %316, %336 in 1 : vector<16x1xf32>, vector<16x1xf32>, vector<16x1xf32>, vector<16x1xf32>, vector<16x1xf32>, vector<16x1xf32>, vector<16x1xf32>, vector<16x1xf32> -> vector<16x8xf32>
    %338 = tpu.concatenate %175, %337 in 0 : vector<16x8xf32>, vector<16x8xf32> -> vector<32x8xf32>
    %c0_58 = arith.constant 0 : index
    %c0_59 = arith.constant 0 : index
    %339 = vector.load %arg2[%c0_58, %c0_59] : memref<8x8xf32, #tpu.memory_space<vmem>>, vector<8x8xf32>
    %cst_60 = arith.constant dense<0.000000e+00> : vector<32x8xf32>
    %340 = tpu.matmul %338, %339, %cst_60 {dimension_numbers = #tpu.dot_dimension_numbers<[1], [0], [0], [1], [0, 0, 1, 1], [], []>} : vector<32x8xf32>, vector<8x8xf32>, vector<32x8xf32> -> vector<32x8xf32>
    %341 = vector.broadcast %1 : vector<1x8xf32> to vector<32x8xf32>
    %342 = arith.addf %340, %341 : vector<32x8xf32>
    %343 = arith.addf %342, %0 : vector<32x8xf32>
    %cst_61 = arith.constant dense<0.000000e+00> : vector<32xf32>
    %344 = vector.multi_reduction <add>, %343, %cst_61 [1] : vector<32x8xf32> to vector<32xf32>
    %345 = vector.shape_cast %344 : vector<32xf32> to vector<32x1xf32>
    %cst_62 = arith.constant 8.000000e+00 : f32
    %346 = vector.broadcast %cst_62 : f32 to vector<32x1xf32>
    %347 = arith.divf %345, %346 : vector<32x1xf32>
    %348 = vector.broadcast %347 : vector<32x1xf32> to vector<32x8xf32>
    %349 = arith.subf %343, %348 : vector<32x8xf32>
    %350 = arith.mulf %349, %349 : vector<32x8xf32>
    %cst_63 = arith.constant dense<0.000000e+00> : vector<32xf32>
    %351 = vector.multi_reduction <add>, %350, %cst_63 [1] : vector<32x8xf32> to vector<32xf32>
    %352 = vector.shape_cast %351 : vector<32xf32> to vector<32x1xf32>
    %cst_64 = arith.constant 8.000000e+00 : f32
    %353 = vector.broadcast %cst_64 : f32 to vector<32x1xf32>
    %354 = arith.divf %352, %353 : vector<32x1xf32>
    %cst_65 = arith.constant 9.99999974E-6 : f32
    %355 = vector.broadcast %cst_65 : f32 to vector<32x1xf32>
    %356 = arith.addf %354, %355 : vector<32x1xf32>
    %357 = math.rsqrt %356 : vector<32x1xf32>
    %358 = vector.broadcast %357 : vector<32x1xf32> to vector<32x8xf32>
    %359 = arith.mulf %349, %358 : vector<32x8xf32>
    %360 = vector.broadcast %2 : vector<1x8xf32> to vector<32x8xf32>
    %361 = arith.mulf %359, %360 : vector<32x8xf32>
    %362 = vector.broadcast %3 : vector<1x8xf32> to vector<32x8xf32>
    %363 = arith.addf %361, %362 : vector<32x8xf32>
    %c0_66 = arith.constant 0 : index
    %c0_67 = arith.constant 0 : index
    %364 = vector.load %arg3[%c0_66, %c0_67] : memref<8x32xf32, #tpu.memory_space<vmem>>, vector<8x32xf32>
    %cst_68 = arith.constant dense<0.000000e+00> : vector<32x32xf32>
    %365 = tpu.matmul %363, %364, %cst_68 {dimension_numbers = #tpu.dot_dimension_numbers<[1], [0], [0], [1], [0, 0, 1, 1], [], []>} : vector<32x8xf32>, vector<8x32xf32>, vector<32x32xf32> -> vector<32x32xf32>
    %c0_69 = arith.constant 0 : index
    %c0_70 = arith.constant 0 : index
    %366 = vector.load %arg4[%c0_69, %c0_70] : memref<1x32xf32, #tpu.memory_space<vmem>>, vector<1x32xf32>
    %367 = vector.broadcast %366 : vector<1x32xf32> to vector<32x32xf32>
    %368 = arith.addf %365, %367 : vector<32x32xf32>
    %cst_71 = arith.constant 0.000000e+00 : f32
    %369 = vector.broadcast %cst_71 : f32 to vector<32x32xf32>
    %370 = arith.maximumf %368, %369 : vector<32x32xf32>
    %c0_72 = arith.constant 0 : index
    %c0_73 = arith.constant 0 : index
    %371 = vector.load %arg5[%c0_72, %c0_73] : memref<32x8xf32, #tpu.memory_space<vmem>>, vector<32x8xf32>
    %cst_74 = arith.constant dense<0.000000e+00> : vector<32x8xf32>
    %372 = tpu.matmul %370, %371, %cst_74 {dimension_numbers = #tpu.dot_dimension_numbers<[1], [0], [0], [1], [0, 0, 1, 1], [], []>} : vector<32x32xf32>, vector<32x8xf32>, vector<32x8xf32> -> vector<32x8xf32>
    %373 = vector.broadcast %4 : vector<1x8xf32> to vector<32x8xf32>
    %374 = arith.addf %372, %373 : vector<32x8xf32>
    %375 = arith.addf %374, %363 : vector<32x8xf32>
    %cst_75 = arith.constant dense<0.000000e+00> : vector<32xf32>
    %376 = vector.multi_reduction <add>, %375, %cst_75 [1] : vector<32x8xf32> to vector<32xf32>
    %377 = vector.shape_cast %376 : vector<32xf32> to vector<32x1xf32>
    %cst_76 = arith.constant 8.000000e+00 : f32
    %378 = vector.broadcast %cst_76 : f32 to vector<32x1xf32>
    %379 = arith.divf %377, %378 : vector<32x1xf32>
    %380 = vector.broadcast %379 : vector<32x1xf32> to vector<32x8xf32>
    %381 = arith.subf %375, %380 : vector<32x8xf32>
    %382 = arith.mulf %381, %381 : vector<32x8xf32>
    %cst_77 = arith.constant dense<0.000000e+00> : vector<32xf32>
    %383 = vector.multi_reduction <add>, %382, %cst_77 [1] : vector<32x8xf32> to vector<32xf32>
    %384 = vector.shape_cast %383 : vector<32xf32> to vector<32x1xf32>
    %cst_78 = arith.constant 8.000000e+00 : f32
    %385 = vector.broadcast %cst_78 : f32 to vector<32x1xf32>
    %386 = arith.divf %384, %385 : vector<32x1xf32>
    %cst_79 = arith.constant 9.99999974E-6 : f32
    %387 = vector.broadcast %cst_79 : f32 to vector<32x1xf32>
    %388 = arith.addf %386, %387 : vector<32x1xf32>
    %389 = math.rsqrt %388 : vector<32x1xf32>
    %390 = vector.broadcast %389 : vector<32x1xf32> to vector<32x8xf32>
    %391 = arith.mulf %381, %390 : vector<32x8xf32>
    %392 = vector.broadcast %5 : vector<1x8xf32> to vector<32x8xf32>
    %393 = arith.mulf %391, %392 : vector<32x8xf32>
    %394 = vector.broadcast %6 : vector<1x8xf32> to vector<32x8xf32>
    %395 = arith.addf %393, %394 : vector<32x8xf32>
    %c0_80 = arith.constant 0 : index
    %c0_81 = arith.constant 0 : index
    %396 = vector.load %arg7[%c0_80, %c0_81] : memref<32x8xf32, #tpu.memory_space<vmem>>, vector<32x8xf32>
    tpu.vector_store %arg7[%c0_80, %c0_81], %395 {strides = array<i32>} : memref<32x8xf32, #tpu.memory_space<vmem>>, vector<32x8xf32>,
    return
  }
}

</mosaic_0001>

<llo_original>
// kernel: tpu_custom_call.1
$region0: #{tpu_custom_call.1}
  #allocation0 [shape = 'u32[]', space=smem, size = 0x4, offset = 0x4, fixed_abs, tag = 'smem constant byte address 0x4 - core index']
  #allocation1 [shape = 'u32[144,128]{1,0:T(1,128)}', space=vmem, size = 0x12000, scoped, tag = 'internal scratch']
  %s0 = inlined_call_operand.vmem [shape: f32[32,8], index: 0, kind: input, shape index: {}]
  %s1 = inlined_call_operand.vmem [shape: f32[8,24], index: 1, kind: input, shape index: {}]
  %s2 = inlined_call_operand.vmem [shape: f32[8,8], index: 2, kind: input, shape index: {}]
  %s3 = inlined_call_operand.vmem [shape: f32[8,32], index: 3, kind: input, shape index: {}]
  %s4 = inlined_call_operand.vmem [shape: f32[1,32], index: 4, kind: input, shape index: {}]
  %s5 = inlined_call_operand.vmem [shape: f32[32,8], index: 5, kind: input, shape index: {}]
  %s6 = inlined_call_operand.vmem [shape: f32[6,8], index: 6, kind: input, shape index: {}]
  %s7 = inlined_call_operand.vmem [shape: f32[32,8], index: 7, kind: output, shape index: {}]
  %s8 = sld [smem:[#allocation0]]
  $region38: #{tpu_custom_call.1} parent=0
    _
  %s10 = ssub.s32 1, %s8
  %s11 = scalar_select 0, %s10, %s8
  // Predicated region
  $region2: #{tpu_custom_call.1} parent=0 // pred_check
    _
  $region3: #{tpu_custom_call.1} parent=0 // pred_check_branch
    %13 = sbr.rel (0) target = $region5
  $region4: #{tpu_custom_call.1} parent=0 // pred_region
    _
  $region5: #{tpu_custom_call.1} parent=0 // pred_fallthru
    _
  // Predicated region
  $region6: #{tpu_custom_call.1} parent=0 // pred_check
    _
  $region7: #{tpu_custom_call.1} parent=0 // pred_check_branch
    %15 = sbr.rel (0) target = $region9
  $region8: #{tpu_custom_call.1} parent=0 // pred_region
    _
  $region9: #{tpu_custom_call.1} parent=0 // pred_fallthru
    _
  // Predicated region
  $region10: #{tpu_custom_call.1} parent=0 // pred_check
    _
  $region11: #{tpu_custom_call.1} parent=0 // pred_check_branch
    %17 = sbr.rel (0) target = $region13
  $region12: #{tpu_custom_call.1} parent=0 // pred_region
    _
  $region13: #{tpu_custom_call.1} parent=0 // pred_fallthru
    _
  // Predicated region
  $region14: #{tpu_custom_call.1} parent=0 // pred_check
    _
  $region15: #{tpu_custom_call.1} parent=0 // pred_check_branch
    %19 = sbr.rel (0) target = $region17
  $region16: #{tpu_custom_call.1} parent=0 // pred_region
    _
  $region17: #{tpu_custom_call.1} parent=0 // pred_fallthru
    _
  // Predicated region
  $region18: #{tpu_custom_call.1} parent=0 // pred_check
    _
  $region19: #{tpu_custom_call.1} parent=0 // pred_check_branch
    %21 = sbr.rel (0) target = $region21
  $region20: #{tpu_custom_call.1} parent=0 // pred_region
    _
  $region21: #{tpu_custom_call.1} parent=0 // pred_fallthru
    _
  // Predicated region
  $region22: #{tpu_custom_call.1} parent=0 // pred_check
    _
  $region23: #{tpu_custom_call.1} parent=0 // pred_check_branch
    %23 = sbr.rel (0) target = $region25
  $region24: #{tpu_custom_call.1} parent=0 // pred_region
    _
  $region25: #{tpu_custom_call.1} parent=0 // pred_fallthru
    _
  // Predicated region
  $region26: #{tpu_custom_call.1} parent=0 // pred_check
    _
  $region27: #{tpu_custom_call.1} parent=0 // pred_check_branch
    %25 = sbr.rel (0) target = $region29
  $region28: #{tpu_custom_call.1} parent=0 // pred_region
    _
  $region29: #{tpu_custom_call.1} parent=0 // pred_fallthru
    _
  %v26 = vld [vmem:[%s0] sm:$0xff]
  %v27 = vld [vmem:[%s0 + $0x8] sm:$0xff]
  %v28 = vld [vmem:[%s0 + $0x10] sm:$0xff]
  %v29 = vld [vmem:[%s0 + $0x18] sm:$0xff]
  %v30 = vld [vmem:[%s6] sm:$0x1]
  %v31 = vld [vmem:[%s6 + $0x1] sm:$0x1]
  %v32 = vld [vmem:[%s6 + $0x2] sm:$0x1]
  %v33 = vld [vmem:[%s6 + $0x3] sm:$0x1]
  %v34 = vld [vmem:[%s6 + $0x4] sm:$0x1]
  %v35 = vld [vmem:[%s6 + $0x5] sm:$0x1]
  %v36 = vld [vmem:[%s1] sm:$0xff]
  %vm37 = vcmask 64512
  %v39 = vsel %vm37, %v26, 0
  %v42 = vsel %vm37, %v27, 0
  %v45 = vsel %vm37, %v28, 0
  %v48 = vsel %vm37, %v29, 0
  %50 = vmatprep.subr.mxu0 0.0
  %51 = vmatpush1.msra.mxu0 %v36
  %52 = vmatprep.subr.mxu0 0.0
  %53 = vmatpush1.msra.mxu0 0.0
  %54 = vmatprep.subr.mxu0 0.0
  %55 = vmatpush1.msra.mxu0 0.0
  %56 = vmatprep.subr.mxu0 0.0
  %57 = vmatpush1.msra.mxu0 0.0
  %58 = vmatprep.subr.mxu0 0.0
  %59 = vmatpush1.msra.mxu0 0.0
  %60 = vmatprep.subr.mxu0 0.0
  %61 = vmatpush1.msra.mxu0 0.0
  %62 = vmatprep.subr.mxu0 0.0
  %63 = vmatpush1.msra.mxu0 0.0
  %64 = vmatprep.subr.mxu0 0.0
  %65 = vmatpush1.msra.mxu0 0.0
  %66 = vmatprep.subr.mxu0 0.0
  %67 = vmatpush1.msra.mxu0 0.0
  %68 = vmatprep.subr.mxu0 0.0
  %69 = vmatpush1.msra.mxu0 0.0
  %70 = vmatprep.subr.mxu0 0.0
  %71 = vmatpush1.msra.mxu0 0.0
  %72 = vmatprep.subr.mxu0 0.0
  %73 = vmatpush1.msra.mxu0 0.0
  %74 = vmatprep.subr.mxu0 0.0
  %75 = vmatpush1.msra.mxu0 0.0
  %76 = vmatprep.subr.mxu0 0.0
  %77 = vmatpush1.msra.mxu0 0.0
  %78 = vmatprep.subr.mxu0 0.0
  %79 = vmatpush1.msra.mxu0 0.0
  %80 = vmatprep.subr.mxu0 0.0
  %81 = vmatpush1.msra.mxu0 0.0
  %82 = vmatprep.subr.mxu0 0.0
  %83 = vmatpush1.msra.mxu0 0.0
  %84 = vmatprep.subr.mxu0 0.0
  %85 = vmatpush1.msra.mxu0 0.0
  %86 = vmatprep.subr.mxu0 0.0
  %87 = vmatpush1.msra.mxu0 0.0
  %88 = vmatprep.subr.mxu0 0.0
  %89 = vmatpush1.msra.mxu0 0.0
  %90 = vmatprep.subr.mxu0 0.0
  %91 = vmatpush1.msra.mxu0 0.0
  %92 = vmatprep.subr.mxu0 0.0
  %93 = vmatpush1.msra.mxu0 0.0
  %94 = vmatprep.subr.mxu0 0.0
  %95 = vmatpush1.msra.mxu0 0.0
  %96 = vmatprep.subr.mxu0 0.0
  %97 = vmatpush1.msra.mxu0 0.0
  %98 = vmatprep.subr.mxu0 0.0
  %99 = vmatpush1.msra.mxu0 0.0
  %100 = vmatprep.subr.mxu0 0.0
  %101 = vmatpush1.msra.mxu0 0.0
  %102 = vmatprep.subr.mxu0 0.0
  %103 = vmatpush1.msra.mxu0 0.0
  %104 = vmatprep.subr.mxu0 0.0
  %105 = vmatpush1.msra.mxu0 0.0
  %106 = vmatprep.subr.mxu0 0.0
  %107 = vmatpush1.msra.mxu0 0.0
  %108 = vmatprep.subr.mxu0 0.0
  %109 = vmatpush1.msra.mxu0 0.0
  %110 = vmatprep.subr.mxu0 0.0
  %111 = vmatpush1.msra.mxu0 0.0
  %112 = vmatprep.subr.mxu0 0.0
  %113 = vmatpush1.msra.mxu0 0.0
  %114 = vmatprep.mubr.f32.mxu0 0.0
  %115 = vmatmul.mubr.f32.gmra.mrb[0].mxu0 %v39
  %v116 = vpop.f32.mrb[0].mxu0
  %v117 = vadd.f32 0.0, %v116
  %v118 = vpop.f32.mrb[0].mxu0
  %119 = vmatprep.mubr.f32.mxu0 0.0
  %120 = vmatmul.mubr.f32.gmra.mrb[0].mxu0 %v42
  %v121 = vpop.f32.mrb[0].mxu0
  %v122 = vadd.f32 0.0, %v121
  %v123 = vpop.f32.mrb[0].mxu0
  %124 = vmatprep.mubr.f32.mxu0 0.0
  %125 = vmatmul.mubr.f32.gmra.mrb[0].mxu0 %v45
  %v126 = vpop.f32.mrb[0].mxu0
  %v127 = vadd.f32 0.0, %v126
  %v128 = vpop.f32.mrb[0].mxu0
  %129 = vmatprep.mubr.f32.mxu0 0.0
  %130 = vmatmul.mubr.f32.gmra.mrb[0].mxu0 %v48
  %v131 = vpop.f32.mrb[0].mxu0
  %v132 = vadd.f32 0.0, %v131
  %v133 = vpop.f32.mrb[0].mxu0
  %134 = vdwg.mxu0
  %139 = vrot.lane.b32.xlu0 %v117, 120
  %v140 = vpop.permute.xlu0 %139
  %141 = vrot.lane.b32.xlu0 %v122, 120
  %v142 = vpop.permute.xlu0 %141
  %143 = vrot.lane.b32.xlu0 %v127, 120
  %v144 = vpop.permute.xlu0 %143
  %145 = vrot.lane.b32.xlu0 %v132, 120
  %v146 = vpop.permute.xlu0 %145
  %151 = vxpose.xlu0.b32.start [1/16] %v140, 128
  %152 = vxpose.xlu0.b32.cont [2/16] %v142, 128
  %153 = vxpose.xlu0.b32.cont [3/16] %v144, 128
  %154 = vxpose.xlu0.b32.cont [4/16] %v146, 128
  %155 = vxpose.xlu0.b32.cont [5/16] 0.0, 128
  %156 = vxpose.xlu0.b32.cont [6/16] 0.0, 128
  %157 = vxpose.xlu0.b32.cont [7/16] 0.0, 128
  %158 = vxpose.xlu0.b32.cont [8/16] 0.0, 128
  %159 = vxpose.xlu0.b32.cont [9/16] 0.0, 128
  %160 = vxpose.xlu0.b32.cont [10/16] 0.0, 128
  %161 = vxpose.xlu0.b32.cont [11/16] 0.0, 128
  %162 = vxpose.xlu0.b32.cont [12/16] 0.0, 128
  %163 = vxpose.xlu0.b32.cont [13/16] 0.0, 128
  %164 = vxpose.xlu0.b32.cont [14/16] 0.0, 128
  %165 = vxpose.xlu0.b32.cont [15/16] 0.0, 128
  %166 = vxpose.xlu0.b32.end [16/16] 0.0, 128
  %v167 = vpop.trf.xlu0
  %v168 = vpop.trf.xlu0
  %v169 = vpop.trf.xlu0
  %v170 = vpop.trf.xlu0
  %v171 = vpop.trf.xlu0
  %v172 = vpop.trf.xlu0
  %v173 = vpop.trf.xlu0
  %v174 = vpop.trf.xlu0
  %v175 = vpop.trf.xlu0
  %v176 = vpop.trf.xlu0
  %v177 = vpop.trf.xlu0
  %v178 = vpop.trf.xlu0
  %v179 = vpop.trf.xlu0
  %v180 = vpop.trf.xlu0
  %v181 = vpop.trf.xlu0
  %v182 = vpop.trf.xlu0
  %183 = vrot.lane.b32.xlu0 %v117, 112
  %v184 = vpop.permute.xlu0 %183
  %185 = vrot.lane.b32.xlu0 %v122, 112
  %v186 = vpop.permute.xlu0 %185
  %187 = vrot.lane.b32.xlu0 %v127, 112
  %v188 = vpop.permute.xlu0 %187
  %189 = vrot.lane.b32.xlu0 %v132, 112
  %v190 = vpop.permute.xlu0 %189
  %195 = vxpose.xlu0.b32.start [1/16] %v184, 128
  %196 = vxpose.xlu0.b32.cont [2/16] %v186, 128
  %197 = vxpose.xlu0.b32.cont [3/16] %v188, 128
  %198 = vxpose.xlu0.b32.cont [4/16] %v190, 128
  %199 = vxpose.xlu0.b32.cont [5/16] 0.0, 128
  %200 = vxpose.xlu0.b32.cont [6/16] 0.0, 128
  %201 = vxpose.xlu0.b32.cont [7/16] 0.0, 128
  %202 = vxpose.xlu0.b32.cont [8/16] 0.0, 128
  %203 = vxpose.xlu0.b32.cont [9/16] 0.0, 128
  %204 = vxpose.xlu0.b32.cont [10/16] 0.0, 128
  %205 = vxpose.xlu0.b32.cont [11/16] 0.0, 128
  %206 = vxpose.xlu0.b32.cont [12/16] 0.0, 128
  %207 = vxpose.xlu0.b32.cont [13/16] 0.0, 128
  %208 = vxpose.xlu0.b32.cont [14/16] 0.0, 128
  %209 = vxpose.xlu0.b32.cont [15/16] 0.0, 128
  %210 = vxpose.xlu0.b32.end [16/16] 0.0, 128
  %v211 = vpop.trf.xlu0
  %v212 = vpop.trf.xlu0
  %v213 = vpop.trf.xlu0
  %v214 = vpop.trf.xlu0
  %v215 = vpop.trf.xlu0
  %v216 = vpop.trf.xlu0
  %v217 = vpop.trf.xlu0
  %v218 = vpop.trf.xlu0
  %v219 = vpop.trf.xlu0
  %v220 = vpop.trf.xlu0
  %v221 = vpop.trf.xlu0
  %v222 = vpop.trf.xlu0
  %v223 = vpop.trf.xlu0
  %v224 = vpop.trf.xlu0
  %v225 = vpop.trf.xlu0
  %v226 = vpop.trf.xlu0
  %227 = vset.pattern.permute.xlu0 0
  %228 = vperm.xlu0 %227, %v117
  %v229 = vpop.permute.xlu0 %228
  %231 = vset.pattern.permute.xlu0 0
  %232 = vperm.xlu0 %231, %v122
  %v233 = vpop.permute.xlu0 %232
  %v235 = vlaneseq
  %v236 = vshrl.u32 %v235, 7
  %v237 = vsub.s32 0, %v236
  %v238 = vrot.slane %v167, %v237
  %v239 = vmul.f32 %v229, %v238
  %v240 = vmul.f32 %v233, %v238
  %vm241 = vcmask 130048
  %v242 = vsel %vm241, %v239, -inf
  %243 = vmax.xlane.f32.xlu0 %v242
  %v244 = vpop.xlane.xlu0 %243
  %v245 = vsel %vm241, %v240, -inf
  %246 = vmax.xlane.f32.xlu0 %v245
  %v247 = vpop.xlane.xlu0 %246
  %v248 = vsub.f32 %v239, %v244
  %v249 = vsub.f32 %v240, %v247
  %v250 = vmul.f32 %v248, 1.442695
  %v251 = vpow.pop %v250
  %v252 = vmul.f32 %v249, 1.442695
  %v253 = vpow.pop %v252
  %v254 = vsel %vm241, %v251, 0.0
  %255 = vadd.xlane.f32.xlu0 %v254
  %v256 = vpop.xlane.xlu0 %255
  %v257 = vsel %vm241, %v253, 0.0
  %258 = vadd.xlane.f32.xlu0 %v257
  %v259 = vpop.xlane.xlu0 %258
  %v260 = vrcp.pop %v256
  %v261 = vrcp.pop %v259
  %v262 = vmul.f32 %v251, %v260
  %v263 = vmul.f32 %v253, %v261
  %v264 = vlaneseq
  %v265 = vshrl.u32 %v264, 7
  %v266 = vsub.s32 0, %v265
  %v267 = vrot.slane %v211, %v266
  %v268 = vmul.f32 %v262, %v267
  %v269 = vmul.f32 %v263, %v267
  %v270 = vsel %vm241, %v268, 0.0
  %271 = vadd.xlane.f32.xlu0 %v270
  %v272 = vpop.xlane.xlu0 %271
  %v273 = vsel %vm241, %v269, 0.0
  %274 = vadd.xlane.f32.xlu0 %v273
  %v275 = vpop.xlane.xlu0 %274
  %276 = vset.pattern.permute.xlu0 1
  %277 = vperm.xlu0 %276, %v117
  %v278 = vpop.permute.xlu0 %277
  %280 = vset.pattern.permute.xlu0 1
  %281 = vperm.xlu0 %280, %v122
  %v282 = vpop.permute.xlu0 %281
  %v284 = vlaneseq
  %v285 = vshrl.u32 %v284, 7
  %v286 = vsub.s32 1, %v285
  %v287 = vrot.slane %v167, %v286
  %v288 = vmul.f32 %v278, %v287
  %v289 = vmul.f32 %v282, %v287
  %v290 = vsel %vm241, %v288, -inf
  %291 = vmax.xlane.f32.xlu0 %v290
  %v292 = vpop.xlane.xlu0 %291
  %v293 = vsel %vm241, %v289, -inf
  %294 = vmax.xlane.f32.xlu0 %v293
  %v295 = vpop.xlane.xlu0 %294
  %v296 = vsub.f32 %v288, %v292
  %v297 = vsub.f32 %v289, %v295
  %v298 = vmul.f32 %v296, 1.442695
  %v299 = vpow.pop %v298
  %v300 = vmul.f32 %v297, 1.442695
  %v301 = vpow.pop %v300
  %v302 = vsel %vm241, %v299, 0.0
  %303 = vadd.xlane.f32.xlu0 %v302
  %v304 = vpop.xlane.xlu0 %303
  %v305 = vsel %vm241, %v301, 0.0
  %306 = vadd.xlane.f32.xlu0 %v305
  %v307 = vpop.xlane.xlu0 %306
  %v308 = vrcp.pop %v304
  %v309 = vrcp.pop %v307
  %v310 = vmul.f32 %v299, %v308
  %v311 = vmul.f32 %v301, %v309
  %v312 = vlaneseq
  %v313 = vshrl.u32 %v312, 7
  %v314 = vsub.s32 1, %v313
  %v315 = vrot.slane %v211, %v314
  %v316 = vmul.f32 %v310, %v315
  %v317 = vmul.f32 %v311, %v315
  %v318 = vsel %vm241, %v316, 0.0
  %319 = vadd.xlane.f32.xlu0 %v318
  %v320 = vpop.xlane.xlu0 %319
  %v321 = vsel %vm241, %v317, 0.0
  %322 = vadd.xlane.f32.xlu0 %v321
  %v323 = vpop.xlane.xlu0 %322
  %324 = vset.pattern.permute.xlu0 2
  %325 = vperm.xlu0 %324, %v117
  %v326 = vpop.permute.xlu0 %325
  %328 = vset.pattern.permute.xlu0 2
  %329 = vperm.xlu0 %328, %v122
  %v330 = vpop.permute.xlu0 %329
  %v332 = vlaneseq
  %v333 = vshrl.u32 %v332, 7
  %v334 = vsub.s32 2, %v333
  %v335 = vrot.slane %v167, %v334
  %v336 = vmul.f32 %v326, %v335
  %v337 = vmul.f32 %v330, %v335
  %v338 = vsel %vm241, %v336, -inf
  %339 = vmax.xlane.f32.xlu0 %v338
  %v340 = vpop.xlane.xlu0 %339
  %v341 = vsel %vm241, %v337, -inf
  %342 = vmax.xlane.f32.xlu0 %v341
  %v343 = vpop.xlane.xlu0 %342
  %v344 = vsub.f32 %v336, %v340
  %v345 = vsub.f32 %v337, %v343
  %v346 = vmul.f32 %v344, 1.442695
  %v347 = vpow.pop %v346
  %v348 = vmul.f32 %v345, 1.442695
  %v349 = vpow.pop %v348
  %v350 = vsel %vm241, %v347, 0.0
  %351 = vadd.xlane.f32.xlu0 %v350
  %v352 = vpop.xlane.xlu0 %351
  %v353 = vsel %vm241, %v349, 0.0
  %354 = vadd.xlane.f32.xlu0 %v353
  %v355 = vpop.xlane.xlu0 %354
  %v356 = vrcp.pop %v352
  %v357 = vrcp.pop %v355
  %v358 = vmul.f32 %v347, %v356
  %v359 = vmul.f32 %v349, %v357
  %v360 = vlaneseq
  %v361 = vshrl.u32 %v360, 7
  %v362 = vsub.s32 2, %v361
  %v363 = vrot.slane %v211, %v362
  %v364 = vmul.f32 %v358, %v363
  %v365 = vmul.f32 %v359, %v363
  %v366 = vsel %vm241, %v364, 0.0
  %367 = vadd.xlane.f32.xlu0 %v366
  %v368 = vpop.xlane.xlu0 %367
  %v369 = vsel %vm241, %v365, 0.0
  %370 = vadd.xlane.f32.xlu0 %v369
  %v371 = vpop.xlane.xlu0 %370
  %372 = vset.pattern.permute.xlu0 3
  %373 = vperm.xlu0 %372, %v117
  %v374 = vpop.permute.xlu0 %373
  %376 = vset.pattern.permute.xlu0 3
  %377 = vperm.xlu0 %376, %v122
  %v378 = vpop.permute.xlu0 %377
  %v380 = vlaneseq
  %v381 = vshrl.u32 %v380, 7
  %v382 = vsub.s32 3, %v381
  %v383 = vrot.slane %v167, %v382
  %v384 = vmul.f32 %v374, %v383
  %v385 = vmul.f32 %v378, %v383
  %v386 = vsel %vm241, %v384, -inf
  %387 = vmax.xlane.f32.xlu0 %v386
  %v388 = vpop.xlane.xlu0 %387
  %v389 = vsel %vm241, %v385, -inf
  %390 = vmax.xlane.f32.xlu0 %v389
  %v391 = vpop.xlane.xlu0 %390
  %v392 = vsub.f32 %v384, %v388
  %v393 = vsub.f32 %v385, %v391
  %v394 = vmul.f32 %v392, 1.442695
  %v395 = vpow.pop %v394
  %v396 = vmul.f32 %v393, 1.442695
  %v397 = vpow.pop %v396
  %v398 = vsel %vm241, %v395, 0.0
  %399 = vadd.xlane.f32.xlu0 %v398
  %v400 = vpop.xlane.xlu0 %399
  %v401 = vsel %vm241, %v397, 0.0
  %402 = vadd.xlane.f32.xlu0 %v401
  %v403 = vpop.xlane.xlu0 %402
  %v404 = vrcp.pop %v400
  %v405 = vrcp.pop %v403
  %v406 = vmul.f32 %v395, %v404
  %v407 = vmul.f32 %v397, %v405
  %v408 = vlaneseq
  %v409 = vshrl.u32 %v408, 7
  %v410 = vsub.s32 3, %v409
  %v411 = vrot.slane %v211, %v410
  %v412 = vmul.f32 %v406, %v411
  %v413 = vmul.f32 %v407, %v411
  %v414 = vsel %vm241, %v412, 0.0
  %415 = vadd.xlane.f32.xlu0 %v414
  %v416 = vpop.xlane.xlu0 %415
  %v417 = vsel %vm241, %v413, 0.0
  %418 = vadd.xlane.f32.xlu0 %v417
  %v419 = vpop.xlane.xlu0 %418
  %420 = vset.pattern.permute.xlu0 4
  %421 = vperm.xlu0 %420, %v117
  %v422 = vpop.permute.xlu0 %421
  %424 = vset.pattern.permute.xlu0 4
  %425 = vperm.xlu0 %424, %v122
  %v426 = vpop.permute.xlu0 %425
  %v428 = vlaneseq
  %v429 = vshrl.u32 %v428, 7
  %v430 = vsub.s32 4, %v429
  %v431 = vrot.slane %v167, %v430
  %v432 = vmul.f32 %v422, %v431
  %v433 = vmul.f32 %v426, %v431
  %v434 = vsel %vm241, %v432, -inf
  %435 = vmax.xlane.f32.xlu0 %v434
  %v436 = vpop.xlane.xlu0 %435
  %v437 = vsel %vm241, %v433, -inf
  %438 = vmax.xlane.f32.xlu0 %v437
  %v439 = vpop.xlane.xlu0 %438
  %v440 = vsub.f32 %v432, %v436
  %v441 = vsub.f32 %v433, %v439
  %v442 = vmul.f32 %v440, 1.442695
  %v443 = vpow.pop %v442
  %v444 = vmul.f32 %v441, 1.442695
  %v445 = vpow.pop %v444
  %v446 = vsel %vm241, %v443, 0.0
  %447 = vadd.xlane.f32.xlu0 %v446
  %v448 = vpop.xlane.xlu0 %447
  %v449 = vsel %vm241, %v445, 0.0
  %450 = vadd.xlane.f32.xlu0 %v449
  %v451 = vpop.xlane.xlu0 %450
  %v452 = vrcp.pop %v448
  %v453 = vrcp.pop %v451
  %v454 = vmul.f32 %v443, %v452
  %v455 = vmul.f32 %v445, %v453
  %v456 = vlaneseq
  %v457 = vshrl.u32 %v456, 7
  %v458 = vsub.s32 4, %v457
  %v459 = vrot.slane %v211, %v458
  %v460 = vmul.f32 %v454, %v459
  %v461 = vmul.f32 %v455, %v459
  %v462 = vsel %vm241, %v460, 0.0
  %463 = vadd.xlane.f32.xlu0 %v462
  %v464 = vpop.xlane.xlu0 %463
  %v465 = vsel %vm241, %v461, 0.0
  %466 = vadd.xlane.f32.xlu0 %v465
  %v467 = vpop.xlane.xlu0 %466
  %468 = vset.pattern.permute.xlu0 5
  %469 = vperm.xlu0 %468, %v117
  %v470 = vpop.permute.xlu0 %469
  %472 = vset.pattern.permute.xlu0 5
  %473 = vperm.xlu0 %472, %v122
  %v474 = vpop.permute.xlu0 %473
  %v476 = vlaneseq
  %v477 = vshrl.u32 %v476, 7
  %v478 = vsub.s32 5, %v477
  %v479 = vrot.slane %v167, %v478
  %v480 = vmul.f32 %v470, %v479
  %v481 = vmul.f32 %v474, %v479
  %v482 = vsel %vm241, %v480, -inf
  %483 = vmax.xlane.f32.xlu0 %v482
  %v484 = vpop.xlane.xlu0 %483
  %v485 = vsel %vm241, %v481, -inf
  %486 = vmax.xlane.f32.xlu0 %v485
  %v487 = vpop.xlane.xlu0 %486
  %v488 = vsub.f32 %v480, %v484
  %v489 = vsub.f32 %v481, %v487
  %v490 = vmul.f32 %v488, 1.442695
  %v491 = vpow.pop %v490
  %v492 = vmul.f32 %v489, 1.442695
  %v493 = vpow.pop %v492
  %v494 = vsel %vm241, %v491, 0.0
  %495 = vadd.xlane.f32.xlu0 %v494
  %v496 = vpop.xlane.xlu0 %495
  %v497 = vsel %vm241, %v493, 0.0
  %498 = vadd.xlane.f32.xlu0 %v497
  %v499 = vpop.xlane.xlu0 %498
  %v500 = vrcp.pop %v496
  %v501 = vrcp.pop %v499
  %v502 = vmul.f32 %v491, %v500
  %v503 = vmul.f32 %v493, %v501
  %v504 = vlaneseq
  %v505 = vshrl.u32 %v504, 7
  %v506 = vsub.s32 5, %v505
  %v507 = vrot.slane %v211, %v506
  %v508 = vmul.f32 %v502, %v507
  %v509 = vmul.f32 %v503, %v507
  %v510 = vsel %vm241, %v508, 0.0
  %511 = vadd.xlane.f32.xlu0 %v510
  %v512 = vpop.xlane.xlu0 %511
  %v513 = vsel %vm241, %v509, 0.0
  %514 = vadd.xlane.f32.xlu0 %v513
  %v515 = vpop.xlane.xlu0 %514
  %516 = vset.pattern.permute.xlu0 6
  %517 = vperm.xlu0 %516, %v117
  %v518 = vpop.permute.xlu0 %517
  %520 = vset.pattern.permute.xlu0 6
  %521 = vperm.xlu0 %520, %v122
  %v522 = vpop.permute.xlu0 %521
  %v524 = vlaneseq
  %v525 = vshrl.u32 %v524, 7
  %v526 = vsub.s32 6, %v525
  %v527 = vrot.slane %v167, %v526
  %v528 = vmul.f32 %v518, %v527
  %v529 = vmul.f32 %v522, %v527
  %v530 = vsel %vm241, %v528, -inf
  %531 = vmax.xlane.f32.xlu0 %v530
  %v532 = vpop.xlane.xlu0 %531
  %v533 = vsel %vm241, %v529, -inf
  %534 = vmax.xlane.f32.xlu0 %v533
  %v535 = vpop.xlane.xlu0 %534
  %v536 = vsub.f32 %v528, %v532
  %v537 = vsub.f32 %v529, %v535
  %v538 = vmul.f32 %v536, 1.442695
  %v539 = vpow.pop %v538
  %v540 = vmul.f32 %v537, 1.442695
  %v541 = vpow.pop %v540
  %v542 = vsel %vm241, %v539, 0.0
  %543 = vadd.xlane.f32.xlu0 %v542
  %v544 = vpop.xlane.xlu0 %543
  %v545 = vsel %vm241, %v541, 0.0
  %546 = vadd.xlane.f32.xlu0 %v545
  %v547 = vpop.xlane.xlu0 %546
  %v548 = vrcp.pop %v544
  %v549 = vrcp.pop %v547
  %v550 = vmul.f32 %v539, %v548
  %v551 = vmul.f32 %v541, %v549
  %v552 = vlaneseq
  %v553 = vshrl.u32 %v552, 7
  %v554 = vsub.s32 6, %v553
  %v555 = vrot.slane %v211, %v554
  %v556 = vmul.f32 %v550, %v555
  %v557 = vmul.f32 %v551, %v555
  %v558 = vsel %vm241, %v556, 0.0
  %559 = vadd.xlane.f32.xlu0 %v558
  %v560 = vpop.xlane.xlu0 %559
  %v561 = vsel %vm241, %v557, 0.0
  %562 = vadd.xlane.f32.xlu0 %v561
  %v563 = vpop.xlane.xlu0 %562
  %564 = vset.pattern.permute.xlu0 7
  %565 = vperm.xlu0 %564, %v117
  %v566 = vpop.permute.xlu0 %565
  %568 = vset.pattern.permute.xlu0 7
  %569 = vperm.xlu0 %568, %v122
  %v570 = vpop.permute.xlu0 %569
  %v572 = vlaneseq
  %v573 = vshrl.u32 %v572, 7
  %v574 = vsub.s32 7, %v573
  %v575 = vrot.slane %v167, %v574
  %v576 = vmul.f32 %v566, %v575
  %v577 = vmul.f32 %v570, %v575
  %v578 = vsel %vm241, %v576, -inf
  %579 = vmax.xlane.f32.xlu0 %v578
  %v580 = vpop.xlane.xlu0 %579
  %v581 = vsel %vm241, %v577, -inf
  %582 = vmax.xlane.f32.xlu0 %v581
  %v583 = vpop.xlane.xlu0 %582
  %v584 = vsub.f32 %v576, %v580
  %v585 = vsub.f32 %v577, %v583
  %v586 = vmul.f32 %v584, 1.442695
  %v587 = vpow.pop %v586
  %v588 = vmul.f32 %v585, 1.442695
  %v589 = vpow.pop %v588
  %v590 = vsel %vm241, %v587, 0.0
  %591 = vadd.xlane.f32.xlu0 %v590
  %v592 = vpop.xlane.xlu0 %591
  %v593 = vsel %vm241, %v589, 0.0
  %594 = vadd.xlane.f32.xlu0 %v593
  %v595 = vpop.xlane.xlu0 %594
  %v596 = vrcp.pop %v592
  %v597 = vrcp.pop %v595
  %v598 = vmul.f32 %v587, %v596
  %v599 = vmul.f32 %v589, %v597
  %v600 = vlaneseq
  %v601 = vshrl.u32 %v600, 7
  %v602 = vsub.s32 7, %v601
  %v603 = vrot.slane %v211, %v602
  %v604 = vmul.f32 %v598, %v603
  %v605 = vmul.f32 %v599, %v603
  %v606 = vsel %vm241, %v604, 0.0
  %607 = vadd.xlane.f32.xlu0 %v606
  %v608 = vpop.xlane.xlu0 %607
  %v609 = vsel %vm241, %v605, 0.0
  %610 = vadd.xlane.f32.xlu0 %v609
  %v611 = vpop.xlane.xlu0 %610
  %vm612 = vcmask 7168
  %v613 = vsel %vm612, %v272, %v320
  %v614 = vsel %vm612, %v275, %v323
  %vm615 = vcmask 15360
  %v616 = vsel %vm615, %v613, %v368
  %v617 = vsel %vm615, %v614, %v371
  %vm618 = vcmask 23552
  %v619 = vsel %vm618, %v616, %v416
  %v620 = vsel %vm618, %v617, %v419
  %vm621 = vcmask 31744
  %v622 = vsel %vm621, %v619, %v464
  %v623 = vsel %vm621, %v620, %v467
  %vm624 = vcmask 39936
  %v625 = vsel %vm624, %v622, %v512
  %v626 = vsel %vm624, %v623, %v515
  %vm627 = vcmask 48128
  %v628 = vsel %vm627, %v625, %v560
  %v629 = vsel %vm627, %v626, %v563
  %vm630 = vcmask 56320
  %v631 = vsel %vm630, %v628, %v608
  %v632 = vsel %vm630, %v629, %v611
  %633 = vset.pattern.permute.xlu0 0
  %634 = vperm.xlu0 %633, %v127
  %v635 = vpop.permute.xlu0 %634
  %637 = vset.pattern.permute.xlu0 0
  %638 = vperm.xlu0 %637, %v132
  %v639 = vpop.permute.xlu0 %638
  %v641 = vmul.f32 %v635, %v238
  %v642 = vmul.f32 %v639, %v238
  %vm643 = vcmask 261248
  %v644 = vsel %vm643, %v641, -inf
  %645 = vmax.xlane.f32.xlu0 %v644
  %v646 = vpop.xlane.xlu0 %645
  %v647 = vsel %vm643, %v642, -inf
  %648 = vmax.xlane.f32.xlu0 %v647
  %v649 = vpop.xlane.xlu0 %648
  %v650 = vsub.f32 %v641, %v646
  %v651 = vsub.f32 %v642, %v649
  %v652 = vmul.f32 %v650, 1.442695
  %v653 = vpow.pop %v652
  %v654 = vmul.f32 %v651, 1.442695
  %v655 = vpow.pop %v654
  %658 = vrot.lane.b32.xlu0 %v653, 112
  %v659 = vpop.permute.xlu0 %658
  %660 = vrot.lane.b32.xlu0 %v655, 112
  %v661 = vpop.permute.xlu0 %660
  %v664 = vsel %vm241, %v659, 0.0
  %665 = vadd.xlane.f32.xlu0 %v664
  %v666 = vpop.xlane.xlu0 %665
  %v667 = vsel %vm241, %v661, 0.0
  %668 = vadd.xlane.f32.xlu0 %v667
  %v669 = vpop.xlane.xlu0 %668
  %v670 = vrcp.pop %v666
  %v671 = vrcp.pop %v669
  %v672 = vmul.f32 %v653, %v670
  %v673 = vmul.f32 %v655, %v671
  %v674 = vmul.f32 %v672, %v267
  %v675 = vmul.f32 %v673, %v267
  %678 = vrot.lane.b32.xlu0 %v674, 112
  %v679 = vpop.permute.xlu0 %678
  %680 = vrot.lane.b32.xlu0 %v675, 112
  %v681 = vpop.permute.xlu0 %680
  %v684 = vsel %vm241, %v679, 0.0
  %685 = vadd.xlane.f32.xlu0 %v684
  %v686 = vpop.xlane.xlu0 %685
  %v687 = vsel %vm241, %v681, 0.0
  %688 = vadd.xlane.f32.xlu0 %v687
  %v689 = vpop.xlane.xlu0 %688
  %690 = vset.pattern.permute.xlu0 1
  %691 = vperm.xlu0 %690, %v127
  %v692 = vpop.permute.xlu0 %691
  %694 = vset.pattern.permute.xlu0 1
  %695 = vperm.xlu0 %694, %v132
  %v696 = vpop.permute.xlu0 %695
  %v698 = vmul.f32 %v692, %v287
  %v699 = vmul.f32 %v696, %v287
  %v700 = vsel %vm643, %v698, -inf
  %701 = vmax.xlane.f32.xlu0 %v700
  %v702 = vpop.xlane.xlu0 %701
  %v703 = vsel %vm643, %v699, -inf
  %704 = vmax.xlane.f32.xlu0 %v703
  %v705 = vpop.xlane.xlu0 %704
  %v706 = vsub.f32 %v698, %v702
  %v707 = vsub.f32 %v699, %v705
  %v708 = vmul.f32 %v706, 1.442695
  %v709 = vpow.pop %v708
  %v710 = vmul.f32 %v707, 1.442695
  %v711 = vpow.pop %v710
  %714 = vrot.lane.b32.xlu0 %v709, 112
  %v715 = vpop.permute.xlu0 %714
  %716 = vrot.lane.b32.xlu0 %v711, 112
  %v717 = vpop.permute.xlu0 %716
  %v720 = vsel %vm241, %v715, 0.0
  %721 = vadd.xlane.f32.xlu0 %v720
  %v722 = vpop.xlane.xlu0 %721
  %v723 = vsel %vm241, %v717, 0.0
  %724 = vadd.xlane.f32.xlu0 %v723
  %v725 = vpop.xlane.xlu0 %724
  %v726 = vrcp.pop %v722
  %v727 = vrcp.pop %v725
  %v728 = vmul.f32 %v709, %v726
  %v729 = vmul.f32 %v711, %v727
  %v730 = vmul.f32 %v728, %v315
  %v731 = vmul.f32 %v729, %v315
  %734 = vrot.lane.b32.xlu0 %v730, 112
  %v735 = vpop.permute.xlu0 %734
  %736 = vrot.lane.b32.xlu0 %v731, 112
  %v737 = vpop.permute.xlu0 %736
  %v740 = vsel %vm241, %v735, 0.0
  %741 = vadd.xlane.f32.xlu0 %v740
  %v742 = vpop.xlane.xlu0 %741
  %v743 = vsel %vm241, %v737, 0.0
  %744 = vadd.xlane.f32.xlu0 %v743
  %v745 = vpop.xlane.xlu0 %744
  %746 = vset.pattern.permute.xlu0 2
  %747 = vperm.xlu0 %746, %v127
  %v748 = vpop.permute.xlu0 %747
  %750 = vset.pattern.permute.xlu0 2
  %751 = vperm.xlu0 %750, %v132
  %v752 = vpop.permute.xlu0 %751
  %v754 = vmul.f32 %v748, %v335
  %v755 = vmul.f32 %v752, %v335
  %v756 = vsel %vm643, %v754, -inf
  %757 = vmax.xlane.f32.xlu0 %v756
  %v758 = vpop.xlane.xlu0 %757
  %v759 = vsel %vm643, %v755, -inf
  %760 = vmax.xlane.f32.xlu0 %v759
  %v761 = vpop.xlane.xlu0 %760
  %v762 = vsub.f32 %v754, %v758
  %v763 = vsub.f32 %v755, %v761
  %v764 = vmul.f32 %v762, 1.442695
  %v765 = vpow.pop %v764
  %v766 = vmul.f32 %v763, 1.442695
  %v767 = vpow.pop %v766
  %770 = vrot.lane.b32.xlu0 %v765, 112
  %v771 = vpop.permute.xlu0 %770
  %772 = vrot.lane.b32.xlu0 %v767, 112
  %v773 = vpop.permute.xlu0 %772
  %v776 = vsel %vm241, %v771, 0.0
  %777 = vadd.xlane.f32.xlu0 %v776
  %v778 = vpop.xlane.xlu0 %777
  %v779 = vsel %vm241, %v773, 0.0
  %780 = vadd.xlane.f32.xlu0 %v779
  %v781 = vpop.xlane.xlu0 %780
  %v782 = vrcp.pop %v778
  %v783 = vrcp.pop %v781
  %v784 = vmul.f32 %v765, %v782
  %v785 = vmul.f32 %v767, %v783
  %v786 = vmul.f32 %v784, %v363
  %v787 = vmul.f32 %v785, %v363
  %790 = vrot.lane.b32.xlu0 %v786, 112
  %v791 = vpop.permute.xlu0 %790
  %792 = vrot.lane.b32.xlu0 %v787, 112
  %v793 = vpop.permute.xlu0 %792
  %v796 = vsel %vm241, %v791, 0.0
  %797 = vadd.xlane.f32.xlu0 %v796
  %v798 = vpop.xlane.xlu0 %797
  %v799 = vsel %vm241, %v793, 0.0
  %800 = vadd.xlane.f32.xlu0 %v799
  %v801 = vpop.xlane.xlu0 %800
  %802 = vset.pattern.permute.xlu0 3
  %803 = vperm.xlu0 %802, %v127
  %v804 = vpop.permute.xlu0 %803
  %806 = vset.pattern.permute.xlu0 3
  %807 = vperm.xlu0 %806, %v132
  %v808 = vpop.permute.xlu0 %807
  %v810 = vmul.f32 %v804, %v383
  %v811 = vmul.f32 %v808, %v383
  %v812 = vsel %vm643, %v810, -inf
  %813 = vmax.xlane.f32.xlu0 %v812
  %v814 = vpop.xlane.xlu0 %813
  %v815 = vsel %vm643, %v811, -inf
  %816 = vmax.xlane.f32.xlu0 %v815
  %v817 = vpop.xlane.xlu0 %816
  %v818 = vsub.f32 %v810, %v814
  %v819 = vsub.f32 %v811, %v817
  %v820 = vmul.f32 %v818, 1.442695
  %v821 = vpow.pop %v820
  %v822 = vmul.f32 %v819, 1.442695
  %v823 = vpow.pop %v822
  %826 = vrot.lane.b32.xlu0 %v821, 112
  %v827 = vpop.permute.xlu0 %826
  %828 = vrot.lane.b32.xlu0 %v823, 112
  %v829 = vpop.permute.xlu0 %828
  %v832 = vsel %vm241, %v827, 0.0
  %833 = vadd.xlane.f32.xlu0 %v832
  %v834 = vpop.xlane.xlu0 %833
  %v835 = vsel %vm241, %v829, 0.0
  %836 = vadd.xlane.f32.xlu0 %v835
  %v837 = vpop.xlane.xlu0 %836
  %v838 = vrcp.pop %v834
  %v839 = vrcp.pop %v837
  %v840 = vmul.f32 %v821, %v838
  %v841 = vmul.f32 %v823, %v839
  %v842 = vmul.f32 %v840, %v411
  %v843 = vmul.f32 %v841, %v411
  %846 = vrot.lane.b32.xlu0 %v842, 112
  %v847 = vpop.permute.xlu0 %846
  %848 = vrot.lane.b32.xlu0 %v843, 112
  %v849 = vpop.permute.xlu0 %848
  %v852 = vsel %vm241, %v847, 0.0
  %853 = vadd.xlane.f32.xlu0 %v852
  %v854 = vpop.xlane.xlu0 %853
  %v855 = vsel %vm241, %v849, 0.0
  %856 = vadd.xlane.f32.xlu0 %v855
  %v857 = vpop.xlane.xlu0 %856
  %858 = vset.pattern.permute.xlu0 4
  %859 = vperm.xlu0 %858, %v127
  %v860 = vpop.permute.xlu0 %859
  %862 = vset.pattern.permute.xlu0 4
  %863 = vperm.xlu0 %862, %v132
  %v864 = vpop.permute.xlu0 %863
  %v866 = vmul.f32 %v860, %v431
  %v867 = vmul.f32 %v864, %v431
  %v868 = vsel %vm643, %v866, -inf
  %869 = vmax.xlane.f32.xlu0 %v868
  %v870 = vpop.xlane.xlu0 %869
  %v871 = vsel %vm643, %v867, -inf
  %872 = vmax.xlane.f32.xlu0 %v871
  %v873 = vpop.xlane.xlu0 %872
  %v874 = vsub.f32 %v866, %v870
  %v875 = vsub.f32 %v867, %v873
  %v876 = vmul.f32 %v874, 1.442695
  %v877 = vpow.pop %v876
  %v878 = vmul.f32 %v875, 1.442695
  %v879 = vpow.pop %v878
  %882 = vrot.lane.b32.xlu0 %v877, 112
  %v883 = vpop.permute.xlu0 %882
  %884 = vrot.lane.b32.xlu0 %v879, 112
  %v885 = vpop.permute.xlu0 %884
  %v888 = vsel %vm241, %v883, 0.0
  %889 = vadd.xlane.f32.xlu0 %v888
  %v890 = vpop.xlane.xlu0 %889
  %v891 = vsel %vm241, %v885, 0.0
  %892 = vadd.xlane.f32.xlu0 %v891
  %v893 = vpop.xlane.xlu0 %892
  %v894 = vrcp.pop %v890
  %v895 = vrcp.pop %v893
  %v896 = vmul.f32 %v877, %v894
  %v897 = vmul.f32 %v879, %v895
  %v898 = vmul.f32 %v896, %v459
  %v899 = vmul.f32 %v897, %v459
  %902 = vrot.lane.b32.xlu0 %v898, 112
  %v903 = vpop.permute.xlu0 %902
  %904 = vrot.lane.b32.xlu0 %v899, 112
  %v905 = vpop.permute.xlu0 %904
  %v908 = vsel %vm241, %v903, 0.0
  %909 = vadd.xlane.f32.xlu0 %v908
  %v910 = vpop.xlane.xlu0 %909
  %v911 = vsel %vm241, %v905, 0.0
  %912 = vadd.xlane.f32.xlu0 %v911
  %v913 = vpop.xlane.xlu0 %912
  %914 = vset.pattern.permute.xlu0 5
  %915 = vperm.xlu0 %914, %v127
  %v916 = vpop.permute.xlu0 %915
  %918 = vset.pattern.permute.xlu0 5
  %919 = vperm.xlu0 %918, %v132
  %v920 = vpop.permute.xlu0 %919
  %v922 = vmul.f32 %v916, %v479
  %v923 = vmul.f32 %v920, %v479
  %v924 = vsel %vm643, %v922, -inf
  %925 = vmax.xlane.f32.xlu0 %v924
  %v926 = vpop.xlane.xlu0 %925
  %v927 = vsel %vm643, %v923, -inf
  %928 = vmax.xlane.f32.xlu0 %v927
  %v929 = vpop.xlane.xlu0 %928
  %v930 = vsub.f32 %v922, %v926
  %v931 = vsub.f32 %v923, %v929
  %v932 = vmul.f32 %v930, 1.442695
  %v933 = vpow.pop %v932
  %v934 = vmul.f32 %v931, 1.442695
  %v935 = vpow.pop %v934
  %938 = vrot.lane.b32.xlu0 %v933, 112
  %v939 = vpop.permute.xlu0 %938
  %940 = vrot.lane.b32.xlu0 %v935, 112
  %v941 = vpop.permute.xlu0 %940
  %v944 = vsel %vm241, %v939, 0.0
  %945 = vadd.xlane.f32.xlu0 %v944
  %v946 = vpop.xlane.xlu0 %945
  %v947 = vsel %vm241, %v941, 0.0
  %948 = vadd.xlane.f32.xlu0 %v947
  %v949 = vpop.xlane.xlu0 %948
  %v950 = vrcp.pop %v946
  %v951 = vrcp.pop %v949
  %v952 = vmul.f32 %v933, %v950
  %v953 = vmul.f32 %v935, %v951
  %v954 = vmul.f32 %v952, %v507
  %v955 = vmul.f32 %v953, %v507
  %958 = vrot.lane.b32.xlu0 %v954, 112
  %v959 = vpop.permute.xlu0 %958
  %960 = vrot.lane.b32.xlu0 %v955, 112
  %v961 = vpop.permute.xlu0 %960
  %v964 = vsel %vm241, %v959, 0.0
  %965 = vadd.xlane.f32.xlu0 %v964
  %v966 = vpop.xlane.xlu0 %965
  %v967 = vsel %vm241, %v961, 0.0
  %968 = vadd.xlane.f32.xlu0 %v967
  %v969 = vpop.xlane.xlu0 %968
  %970 = vset.pattern.permute.xlu0 6
  %971 = vperm.xlu0 %970, %v127
  %v972 = vpop.permute.xlu0 %971
  %974 = vset.pattern.permute.xlu0 6
  %975 = vperm.xlu0 %974, %v132
  %v976 = vpop.permute.xlu0 %975
  %v978 = vmul.f32 %v972, %v527
  %v979 = vmul.f32 %v976, %v527
  %v980 = vsel %vm643, %v978, -inf
  %981 = vmax.xlane.f32.xlu0 %v980
  %v982 = vpop.xlane.xlu0 %981
  %v983 = vsel %vm643, %v979, -inf
  %984 = vmax.xlane.f32.xlu0 %v983
  %v985 = vpop.xlane.xlu0 %984
  %v986 = vsub.f32 %v978, %v982
  %v987 = vsub.f32 %v979, %v985
  %v988 = vmul.f32 %v986, 1.442695
  %v989 = vpow.pop %v988
  %v990 = vmul.f32 %v987, 1.442695
  %v991 = vpow.pop %v990
  %994 = vrot.lane.b32.xlu0 %v989, 112
  %v995 = vpop.permute.xlu0 %994
  %996 = vrot.lane.b32.xlu0 %v991, 112
  %v997 = vpop.permute.xlu0 %996
  %v1000 = vsel %vm241, %v995, 0.0
  %1001 = vadd.xlane.f32.xlu0 %v1000
  %v1002 = vpop.xlane.xlu0 %1001
  %v1003 = vsel %vm241, %v997, 0.0
  %1004 = vadd.xlane.f32.xlu0 %v1003
  %v1005 = vpop.xlane.xlu0 %1004
  %v1006 = vrcp.pop %v1002
  %v1007 = vrcp.pop %v1005
  %v1008 = vmul.f32 %v989, %v1006
  %v1009 = vmul.f32 %v991, %v1007
  %v1010 = vmul.f32 %v1008, %v555
  %v1011 = vmul.f32 %v1009, %v555
  %1014 = vrot.lane.b32.xlu0 %v1010, 112
  %v1015 = vpop.permute.xlu0 %1014
  %1016 = vrot.lane.b32.xlu0 %v1011, 112
  %v1017 = vpop.permute.xlu0 %1016
  %v1020 = vsel %vm241, %v1015, 0.0
  %1021 = vadd.xlane.f32.xlu0 %v1020
  %v1022 = vpop.xlane.xlu0 %1021
  %v1023 = vsel %vm241, %v1017, 0.0
  %1024 = vadd.xlane.f32.xlu0 %v1023
  %v1025 = vpop.xlane.xlu0 %1024
  %1026 = vset.pattern.permute.xlu0 7
  %1027 = vperm.xlu0 %1026, %v127
  %v1028 = vpop.permute.xlu0 %1027
  %1030 = vset.pattern.permute.xlu0 7
  %1031 = vperm.xlu0 %1030, %v132
  %v1032 = vpop.permute.xlu0 %1031
  %v1034 = vmul.f32 %v1028, %v575
  %v1035 = vmul.f32 %v1032, %v575
  %v1036 = vsel %vm643, %v1034, -inf
  %1037 = vmax.xlane.f32.xlu0 %v1036
  %v1038 = vpop.xlane.xlu0 %1037
  %v1039 = vsel %vm643, %v1035, -inf
  %1040 = vmax.xlane.f32.xlu0 %v1039
  %v1041 = vpop.xlane.xlu0 %1040
  %v1042 = vsub.f32 %v1034, %v1038
  %v1043 = vsub.f32 %v1035, %v1041
  %v1044 = vmul.f32 %v1042, 1.442695
  %v1045 = vpow.pop %v1044
  %v1046 = vmul.f32 %v1043, 1.442695
  %v1047 = vpow.pop %v1046
  %1050 = vrot.lane.b32.xlu0 %v1045, 112
  %v1051 = vpop.permute.xlu0 %1050
  %1052 = vrot.lane.b32.xlu0 %v1047, 112
  %v1053 = vpop.permute.xlu0 %1052
  %v1056 = vsel %vm241, %v1051, 0.0
  %1057 = vadd.xlane.f32.xlu0 %v1056
  %v1058 = vpop.xlane.xlu0 %1057
  %v1059 = vsel %vm241, %v1053, 0.0
  %1060 = vadd.xlane.f32.xlu0 %v1059
  %v1061 = vpop.xlane.xlu0 %1060
  %v1062 = vrcp.pop %v1058
  %v1063 = vrcp.pop %v1061
  %v1064 = vmul.f32 %v1045, %v1062
  %v1065 = vmul.f32 %v1047, %v1063
  %v1066 = vmul.f32 %v1064, %v603
  %v1067 = vmul.f32 %v1065, %v603
  %1070 = vrot.lane.b32.xlu0 %v1066, 112
  %v1071 = vpop.permute.xlu0 %1070
  %1072 = vrot.lane.b32.xlu0 %v1067, 112
  %v1073 = vpop.permute.xlu0 %1072
  %v1076 = vsel %vm241, %v1071, 0.0
  %1077 = vadd.xlane.f32.xlu0 %v1076
  %v1078 = vpop.xlane.xlu0 %1077
  %v1079 = vsel %vm241, %v1073, 0.0
  %1080 = vadd.xlane.f32.xlu0 %v1079
  %v1081 = vpop.xlane.xlu0 %1080
  %v1082 = vsel %vm612, %v686, %v742
  %v1083 = vsel %vm612, %v689, %v745
  %v1084 = vsel %vm615, %v1082, %v798
  %v1085 = vsel %vm615, %v1083, %v801
  %v1086 = vsel %vm618, %v1084, %v854
  %v1087 = vsel %vm618, %v1085, %v857
  %v1088 = vsel %vm621, %v1086, %v910
  %v1089 = vsel %vm621, %v1087, %v913
  %v1090 = vsel %vm624, %v1088, %v966
  %v1091 = vsel %vm624, %v1089, %v969
  %v1092 = vsel %vm627, %v1090, %v1022
  %v1093 = vsel %vm627, %v1091, %v1025
  %v1094 = vsel %vm630, %v1092, %v1078
  %v1095 = vsel %vm630, %v1093, %v1081
  %v1096 = vld [vmem:[%s2] sm:$0xff]
  %v1097 = vlaneseq
  %v1098 = vshrl.u32 %v1097, 7
  %v1099 = vsub.s32 0, %v1098
  %v1100 = vrot.slane %v30, %v1099
  %v1102 = vsel %vm37, %v631, 0
  %v1105 = vsel %vm37, %v632, 0
  %v1108 = vsel %vm37, %v1094, 0
  %v1111 = vsel %vm37, %v1095, 0
  %1113 = vmatprep.subr.mxu0 0.0
  %1114 = vmatpush1.msra.mxu0 %v1096
  %1115 = vmatprep.subr.mxu0 0.0
  %1116 = vmatpush1.msra.mxu0 0.0
  %1117 = vmatprep.subr.mxu0 0.0
  %1118 = vmatpush1.msra.mxu0 0.0
  %1119 = vmatprep.subr.mxu0 0.0
  %1120 = vmatpush1.msra.mxu0 0.0
  %1121 = vmatprep.subr.mxu0 0.0
  %1122 = vmatpush1.msra.mxu0 0.0
  %1123 = vmatprep.subr.mxu0 0.0
  %1124 = vmatpush1.msra.mxu0 0.0
  %1125 = vmatprep.subr.mxu0 0.0
  %1126 = vmatpush1.msra.mxu0 0.0
  %1127 = vmatprep.subr.mxu0 0.0
  %1128 = vmatpush1.msra.mxu0 0.0
  %1129 = vmatprep.subr.mxu0 0.0
  %1130 = vmatpush1.msra.mxu0 0.0
  %1131 = vmatprep.subr.mxu0 0.0
  %1132 = vmatpush1.msra.mxu0 0.0
  %1133 = vmatprep.subr.mxu0 0.0
  %1134 = vmatpush1.msra.mxu0 0.0
  %1135 = vmatprep.subr.mxu0 0.0
  %1136 = vmatpush1.msra.mxu0 0.0
  %1137 = vmatprep.subr.mxu0 0.0
  %1138 = vmatpush1.msra.mxu0 0.0
  %1139 = vmatprep.subr.mxu0 0.0
  %1140 = vmatpush1.msra.mxu0 0.0
  %1141 = vmatprep.subr.mxu0 0.0
  %1142 = vmatpush1.msra.mxu0 0.0
  %1143 = vmatprep.subr.mxu0 0.0
  %1144 = vmatpush1.msra.mxu0 0.0
  %1145 = vmatprep.subr.mxu0 0.0
  %1146 = vmatpush1.msra.mxu0 0.0
  %1147 = vmatprep.subr.mxu0 0.0
  %1148 = vmatpush1.msra.mxu0 0.0
  %1149 = vmatprep.subr.mxu0 0.0
  %1150 = vmatpush1.msra.mxu0 0.0
  %1151 = vmatprep.subr.mxu0 0.0
  %1152 = vmatpush1.msra.mxu0 0.0
  %1153 = vmatprep.subr.mxu0 0.0
  %1154 = vmatpush1.msra.mxu0 0.0
  %1155 = vmatprep.subr.mxu0 0.0
  %1156 = vmatpush1.msra.mxu0 0.0
  %1157 = vmatprep.subr.mxu0 0.0
  %1158 = vmatpush1.msra.mxu0 0.0
  %1159 = vmatprep.subr.mxu0 0.0
  %1160 = vmatpush1.msra.mxu0 0.0
  %1161 = vmatprep.subr.mxu0 0.0
  %1162 = vmatpush1.msra.mxu0 0.0
  %1163 = vmatprep.subr.mxu0 0.0
  %1164 = vmatpush1.msra.mxu0 0.0
  %1165 = vmatprep.subr.mxu0 0.0
  %1166 = vmatpush1.msra.mxu0 0.0
  %1167 = vmatprep.subr.mxu0 0.0
  %1168 = vmatpush1.msra.mxu0 0.0
  %1169 = vmatprep.subr.mxu0 0.0
  %1170 = vmatpush1.msra.mxu0 0.0
  %1171 = vmatprep.subr.mxu0 0.0
  %1172 = vmatpush1.msra.mxu0 0.0
  %1173 = vmatprep.subr.mxu0 0.0
  %1174 = vmatpush1.msra.mxu0 0.0
  %1175 = vmatprep.subr.mxu0 0.0
  %1176 = vmatpush1.msra.mxu0 0.0
  %1177 = vmatprep.mubr.f32.mxu0 0.0
  %1178 = vmatmul.mubr.f32.gmra.mrb[0].mxu0 %v1102
  %v1179 = vpop.f32.mrb[0].mxu0
  %v1180 = vadd.f32 %v1100, %v1179
  %v1181 = vpop.f32.mrb[0].mxu0
  %1182 = vmatprep.mubr.f32.mxu0 0.0
  %1183 = vmatmul.mubr.f32.gmra.mrb[0].mxu0 %v1105
  %v1184 = vpop.f32.mrb[0].mxu0
  %v1185 = vadd.f32 %v1100, %v1184
  %v1186 = vpop.f32.mrb[0].mxu0
  %1187 = vmatprep.mubr.f32.mxu0 0.0
  %1188 = vmatmul.mubr.f32.gmra.mrb[0].mxu0 %v1108
  %v1189 = vpop.f32.mrb[0].mxu0
  %v1190 = vadd.f32 %v1100, %v1189
  %v1191 = vpop.f32.mrb[0].mxu0
  %1192 = vmatprep.mubr.f32.mxu0 0.0
  %1193 = vmatmul.mubr.f32.gmra.mrb[0].mxu0 %v1111
  %v1194 = vpop.f32.mrb[0].mxu0
  %v1195 = vadd.f32 %v1100, %v1194
  %v1196 = vpop.f32.mrb[0].mxu0
  %1197 = vdwg.mxu0
  %v1198 = vadd.f32 %v1180, %v26
  %v1199 = vadd.f32 %v1185, %v27
  %v1200 = vadd.f32 %v1190, %v28
  %v1201 = vadd.f32 %v1195, %v29
  %v1202 = vsel %vm37, %v1198, 0.0
  %1203 = vadd.xlane.f32.xlu0 %v1202
  %v1204 = vpop.xlane.xlu0 %1203
  %v1205 = vsel %vm37, %v1199, 0.0
  %1206 = vadd.xlane.f32.xlu0 %v1205
  %v1207 = vpop.xlane.xlu0 %1206
  %v1208 = vsel %vm37, %v1200, 0.0
  %1209 = vadd.xlane.f32.xlu0 %v1208
  %v1210 = vpop.xlane.xlu0 %1209
  %v1211 = vsel %vm37, %v1201, 0.0
  %1212 = vadd.xlane.f32.xlu0 %v1211
  %v1213 = vpop.xlane.xlu0 %1212
  %v1214 = vrcp.pop 8.0
  %v1215 = vmul.f32 %v1204, %v1214
  %v1216 = vmul.f32 %v1207, %v1214
  %v1217 = vmul.f32 %v1210, %v1214
  %v1218 = vmul.f32 %v1213, %v1214
  %v1219 = vsub.f32 %v1198, %v1215
  %v1220 = vsub.f32 %v1199, %v1216
  %v1221 = vsub.f32 %v1200, %v1217
  %v1222 = vsub.f32 %v1201, %v1218
  %v1223 = vmul.f32 %v1219, %v1219
  %v1224 = vmul.f32 %v1220, %v1220
  %v1225 = vmul.f32 %v1221, %v1221
  %v1226 = vmul.f32 %v1222, %v1222
  %v1227 = vsel %vm37, %v1223, 0.0
  %1228 = vadd.xlane.f32.xlu0 %v1227
  %v1229 = vpop.xlane.xlu0 %1228
  %v1230 = vsel %vm37, %v1224, 0.0
  %1231 = vadd.xlane.f32.xlu0 %v1230
  %v1232 = vpop.xlane.xlu0 %1231
  %v1233 = vsel %vm37, %v1225, 0.0
  %1234 = vadd.xlane.f32.xlu0 %v1233
  %v1235 = vpop.xlane.xlu0 %1234
  %v1236 = vsel %vm37, %v1226, 0.0
  %1237 = vadd.xlane.f32.xlu0 %v1236
  %v1238 = vpop.xlane.xlu0 %1237
  %v1239 = vmul.f32 %v1229, %v1214
  %v1240 = vmul.f32 %v1232, %v1214
  %v1241 = vmul.f32 %v1235, %v1214
  %v1242 = vmul.f32 %v1238, %v1214
  %v1243 = vadd.f32 %v1239, 1e-05
  %v1244 = vadd.f32 %v1240, 1e-05
  %v1245 = vadd.f32 %v1241, 1e-05
  %v1246 = vadd.f32 %v1242, 1e-05
  %v1247 = vrsqrt.pop %v1243
  %v1248 = vrsqrt.pop %v1244
  %v1249 = vrsqrt.pop %v1245
  %v1250 = vrsqrt.pop %v1246
  %v1251 = vmul.f32 %v1219, %v1247
  %v1252 = vmul.f32 %v1220, %v1248
  %v1253 = vmul.f32 %v1221, %v1249
  %v1254 = vmul.f32 %v1222, %v1250
  %v1255 = vlaneseq
  %v1256 = vshrl.u32 %v1255, 7
  %v1257 = vsub.s32 0, %v1256
  %v1258 = vrot.slane %v31, %v1257
  %v1259 = vmul.f32 %v1251, %v1258
  %v1260 = vmul.f32 %v1252, %v1258
  %v1261 = vmul.f32 %v1253, %v1258
  %v1262 = vmul.f32 %v1254, %v1258
  %v1263 = vlaneseq
  %v1264 = vshrl.u32 %v1263, 7
  %v1265 = vsub.s32 0, %v1264
  %v1266 = vrot.slane %v32, %v1265
  %v1267 = vadd.f32 %v1259, %v1266
  %v1268 = vadd.f32 %v1260, %v1266
  %v1269 = vadd.f32 %v1261, %v1266
  %v1270 = vadd.f32 %v1262, %v1266
  %v1271 = vld [vmem:[%s3] sm:$0xff]
  %v1272 = vld [vmem:[%s4] sm:$0x1]
  %v1274 = vlaneseq
  %v1275 = vshrl.u32 %v1274, 7
  %v1276 = vsub.s32 0, %v1275
  %v1277 = vrot.slane %v1272, %v1276
  %v1280 = vsel %vm37, %v1267, 0
  %v1283 = vsel %vm37, %v1268, 0
  %v1286 = vsel %vm37, %v1269, 0
  %v1289 = vsel %vm37, %v1270, 0
  %1291 = vmatprep.subr.mxu0 0.0
  %1292 = vmatpush1.msra.mxu0 %v1271
  %1293 = vmatprep.subr.mxu0 0.0
  %1294 = vmatpush1.msra.mxu0 0.0
  %1295 = vmatprep.subr.mxu0 0.0
  %1296 = vmatpush1.msra.mxu0 0.0
  %1297 = vmatprep.subr.mxu0 0.0
  %1298 = vmatpush1.msra.mxu0 0.0
  %1299 = vmatprep.subr.mxu0 0.0
  %1300 = vmatpush1.msra.mxu0 0.0
  %1301 = vmatprep.subr.mxu0 0.0
  %1302 = vmatpush1.msra.mxu0 0.0
  %1303 = vmatprep.subr.mxu0 0.0
  %1304 = vmatpush1.msra.mxu0 0.0
  %1305 = vmatprep.subr.mxu0 0.0
  %1306 = vmatpush1.msra.mxu0 0.0
  %1307 = vmatprep.subr.mxu0 0.0
  %1308 = vmatpush1.msra.mxu0 0.0
  %1309 = vmatprep.subr.mxu0 0.0
  %1310 = vmatpush1.msra.mxu0 0.0
  %1311 = vmatprep.subr.mxu0 0.0
  %1312 = vmatpush1.msra.mxu0 0.0
  %1313 = vmatprep.subr.mxu0 0.0
  %1314 = vmatpush1.msra.mxu0 0.0
  %1315 = vmatprep.subr.mxu0 0.0
  %1316 = vmatpush1.msra.mxu0 0.0
  %1317 = vmatprep.subr.mxu0 0.0
  %1318 = vmatpush1.msra.mxu0 0.0
  %1319 = vmatprep.subr.mxu0 0.0
  %1320 = vmatpush1.msra.mxu0 0.0
  %1321 = vmatprep.subr.mxu0 0.0
  %1322 = vmatpush1.msra.mxu0 0.0
  %1323 = vmatprep.subr.mxu0 0.0
  %1324 = vmatpush1.msra.mxu0 0.0
  %1325 = vmatprep.subr.mxu0 0.0
  %1326 = vmatpush1.msra.mxu0 0.0
  %1327 = vmatprep.subr.mxu0 0.0
  %1328 = vmatpush1.msra.mxu0 0.0
  %1329 = vmatprep.subr.mxu0 0.0
  %1330 = vmatpush1.msra.mxu0 0.0
  %1331 = vmatprep.subr.mxu0 0.0
  %1332 = vmatpush1.msra.mxu0 0.0
  %1333 = vmatprep.subr.mxu0 0.0
  %1334 = vmatpush1.msra.mxu0 0.0
  %1335 = vmatprep.subr.mxu0 0.0
  %1336 = vmatpush1.msra.mxu0 0.0
  %1337 = vmatprep.subr.mxu0 0.0
  %1338 = vmatpush1.msra.mxu0 0.0
  %1339 = vmatprep.subr.mxu0 0.0
  %1340 = vmatpush1.msra.mxu0 0.0
  %1341 = vmatprep.subr.mxu0 0.0
  %1342 = vmatpush1.msra.mxu0 0.0
  %1343 = vmatprep.subr.mxu0 0.0
  %1344 = vmatpush1.msra.mxu0 0.0
  %1345 = vmatprep.subr.mxu0 0.0
  %1346 = vmatpush1.msra.mxu0 0.0
  %1347 = vmatprep.subr.mxu0 0.0
  %1348 = vmatpush1.msra.mxu0 0.0
  %1349 = vmatprep.subr.mxu0 0.0
  %1350 = vmatpush1.msra.mxu0 0.0
  %1351 = vmatprep.subr.mxu0 0.0
  %1352 = vmatpush1.msra.mxu0 0.0
  %1353 = vmatprep.subr.mxu0 0.0
  %1354 = vmatpush1.msra.mxu0 0.0
  %1355 = vmatprep.mubr.f32.mxu0 0.0
  %1356 = vmatmul.mubr.f32.gmra.mrb[0].mxu0 %v1280
  %v1357 = vpop.f32.mrb[0].mxu0
  %v1358 = vadd.f32 %v1277, %v1357
  %v1359 = vpop.f32.mrb[0].mxu0
  %1360 = vmatprep.mubr.f32.mxu0 0.0
  %1361 = vmatmul.mubr.f32.gmra.mrb[0].mxu0 %v1283
  %v1362 = vpop.f32.mrb[0].mxu0
  %v1363 = vadd.f32 %v1277, %v1362
  %v1364 = vpop.f32.mrb[0].mxu0
  %1365 = vmatprep.mubr.f32.mxu0 0.0
  %1366 = vmatmul.mubr.f32.gmra.mrb[0].mxu0 %v1286
  %v1367 = vpop.f32.mrb[0].mxu0
  %v1368 = vadd.f32 %v1277, %v1367
  %v1369 = vpop.f32.mrb[0].mxu0
  %1370 = vmatprep.mubr.f32.mxu0 0.0
  %1371 = vmatmul.mubr.f32.gmra.mrb[0].mxu0 %v1289
  %v1372 = vpop.f32.mrb[0].mxu0
  %v1373 = vadd.f32 %v1277, %v1372
  %v1374 = vpop.f32.mrb[0].mxu0
  %1375 = vdwg.mxu0
  %v1376 = vmax.f32 %v1358, 0.0
  %v1377 = vmax.f32 %v1363, 0.0
  %v1378 = vmax.f32 %v1368, 0.0
  %v1379 = vmax.f32 %v1373, 0.0
  %v1380 = vld [vmem:[%s5] sm:$0xff]
  %v1381 = vld [vmem:[%s5 + $0x8] sm:$0xff]
  %v1382 = vld [vmem:[%s5 + $0x10] sm:$0xff]
  %v1383 = vld [vmem:[%s5 + $0x18] sm:$0xff]
  %v1384 = vlaneseq
  %v1385 = vshrl.u32 %v1384, 7
  %v1386 = vsub.s32 0, %v1385
  %v1387 = vrot.slane %v33, %v1386
  %vm1388 = vcmask 261120
  %v1390 = vsel %vm1388, %v1376, 0
  %v1393 = vsel %vm1388, %v1377, 0
  %v1396 = vsel %vm1388, %v1378, 0
  %v1399 = vsel %vm1388, %v1379, 0
  %1401 = vmatprep.subr.mxu0 0.0
  %1402 = vmatpush1.msra.mxu0 %v1380
  %1403 = vmatprep.subr.mxu0 0.0
  %1404 = vmatpush1.msra.mxu0 %v1381
  %1405 = vmatprep.subr.mxu0 0.0
  %1406 = vmatpush1.msra.mxu0 %v1382
  %1407 = vmatprep.subr.mxu0 0.0
  %1408 = vmatpush1.msra.mxu0 %v1383
  %1409 = vmatprep.subr.mxu0 0.0
  %1410 = vmatpush1.msra.mxu0 0.0
  %1411 = vmatprep.subr.mxu0 0.0
  %1412 = vmatpush1.msra.mxu0 0.0
  %1413 = vmatprep.subr.mxu0 0.0
  %1414 = vmatpush1.msra.mxu0 0.0
  %1415 = vmatprep.subr.mxu0 0.0
  %1416 = vmatpush1.msra.mxu0 0.0
  %1417 = vmatprep.subr.mxu0 0.0
  %1418 = vmatpush1.msra.mxu0 0.0
  %1419 = vmatprep.subr.mxu0 0.0
  %1420 = vmatpush1.msra.mxu0 0.0
  %1421 = vmatprep.subr.mxu0 0.0
  %1422 = vmatpush1.msra.mxu0 0.0
  %1423 = vmatprep.subr.mxu0 0.0
  %1424 = vmatpush1.msra.mxu0 0.0
  %1425 = vmatprep.subr.mxu0 0.0
  %1426 = vmatpush1.msra.mxu0 0.0
  %1427 = vmatprep.subr.mxu0 0.0
  %1428 = vmatpush1.msra.mxu0 0.0
  %1429 = vmatprep.subr.mxu0 0.0
  %1430 = vmatpush1.msra.mxu0 0.0
  %1431 = vmatprep.subr.mxu0 0.0
  %1432 = vmatpush1.msra.mxu0 0.0
  %1433 = vmatprep.subr.mxu0 0.0
  %1434 = vmatpush1.msra.mxu0 0.0
  %1435 = vmatprep.subr.mxu0 0.0
  %1436 = vmatpush1.msra.mxu0 0.0
  %1437 = vmatprep.subr.mxu0 0.0
  %1438 = vmatpush1.msra.mxu0 0.0
  %1439 = vmatprep.subr.mxu0 0.0
  %1440 = vmatpush1.msra.mxu0 0.0
  %1441 = vmatprep.subr.mxu0 0.0
  %1442 = vmatpush1.msra.mxu0 0.0
  %1443 = vmatprep.subr.mxu0 0.0
  %1444 = vmatpush1.msra.mxu0 0.0
  %1445 = vmatprep.subr.mxu0 0.0
  %1446 = vmatpush1.msra.mxu0 0.0
  %1447 = vmatprep.subr.mxu0 0.0
  %1448 = vmatpush1.msra.mxu0 0.0
  %1449 = vmatprep.subr.mxu0 0.0
  %1450 = vmatpush1.msra.mxu0 0.0
  %1451 = vmatprep.subr.mxu0 0.0
  %1452 = vmatpush1.msra.mxu0 0.0
  %1453 = vmatprep.subr.mxu0 0.0
  %1454 = vmatpush1.msra.mxu0 0.0
  %1455 = vmatprep.subr.mxu0 0.0
  %1456 = vmatpush1.msra.mxu0 0.0
  %1457 = vmatprep.subr.mxu0 0.0
  %1458 = vmatpush1.msra.mxu0 0.0
  %1459 = vmatprep.subr.mxu0 0.0
  %1460 = vmatpush1.msra.mxu0 0.0
  %1461 = vmatprep.subr.mxu0 0.0
  %1462 = vmatpush1.msra.mxu0 0.0
  %1463 = vmatprep.subr.mxu0 0.0
  %1464 = vmatpush1.msra.mxu0 0.0
  %1465 = vmatprep.mubr.f32.mxu0 0.0
  %1466 = vmatmul.mubr.f32.gmra.mrb[0].mxu0 %v1390
  %v1467 = vpop.f32.mrb[0].mxu0
  %v1468 = vadd.f32 %v1387, %v1467
  %v1469 = vpop.f32.mrb[0].mxu0
  %1470 = vmatprep.mubr.f32.mxu0 0.0
  %1471 = vmatmul.mubr.f32.gmra.mrb[0].mxu0 %v1393
  %v1472 = vpop.f32.mrb[0].mxu0
  %v1473 = vadd.f32 %v1387, %v1472
  %v1474 = vpop.f32.mrb[0].mxu0
  %1475 = vmatprep.mubr.f32.mxu0 0.0
  %1476 = vmatmul.mubr.f32.gmra.mrb[0].mxu0 %v1396
  %v1477 = vpop.f32.mrb[0].mxu0
  %v1478 = vadd.f32 %v1387, %v1477
  %v1479 = vpop.f32.mrb[0].mxu0
  %1480 = vmatprep.mubr.f32.mxu0 0.0
  %1481 = vmatmul.mubr.f32.gmra.mrb[0].mxu0 %v1399
  %v1482 = vpop.f32.mrb[0].mxu0
  %v1483 = vadd.f32 %v1387, %v1482
  %v1484 = vpop.f32.mrb[0].mxu0
  %1485 = vdwg.mxu0
  %v1486 = vadd.f32 %v1468, %v1267
  %v1487 = vadd.f32 %v1473, %v1268
  %v1488 = vadd.f32 %v1478, %v1269
  %v1489 = vadd.f32 %v1483, %v1270
  %v1490 = vsel %vm37, %v1486, 0.0
  %1491 = vadd.xlane.f32.xlu0 %v1490
  %v1492 = vpop.xlane.xlu0 %1491
  %v1493 = vsel %vm37, %v1487, 0.0
  %1494 = vadd.xlane.f32.xlu0 %v1493
  %v1495 = vpop.xlane.xlu0 %1494
  %v1496 = vsel %vm37, %v1488, 0.0
  %1497 = vadd.xlane.f32.xlu0 %v1496
  %v1498 = vpop.xlane.xlu0 %1497
  %v1499 = vsel %vm37, %v1489, 0.0
  %1500 = vadd.xlane.f32.xlu0 %v1499
  %v1501 = vpop.xlane.xlu0 %1500
  %v1502 = vmul.f32 %v1492, %v1214
  %v1503 = vmul.f32 %v1495, %v1214
  %v1504 = vmul.f32 %v1498, %v1214
  %v1505 = vmul.f32 %v1501, %v1214
  %v1506 = vsub.f32 %v1486, %v1502
  %v1507 = vsub.f32 %v1487, %v1503
  %v1508 = vsub.f32 %v1488, %v1504
  %v1509 = vsub.f32 %v1489, %v1505
  %v1510 = vmul.f32 %v1506, %v1506
  %v1511 = vmul.f32 %v1507, %v1507
  %v1512 = vmul.f32 %v1508, %v1508
  %v1513 = vmul.f32 %v1509, %v1509
  %v1514 = vsel %vm37, %v1510, 0.0
  %1515 = vadd.xlane.f32.xlu0 %v1514
  %v1516 = vpop.xlane.xlu0 %1515
  %v1517 = vsel %vm37, %v1511, 0.0
  %1518 = vadd.xlane.f32.xlu0 %v1517
  %v1519 = vpop.xlane.xlu0 %1518
  %v1520 = vsel %vm37, %v1512, 0.0
  %1521 = vadd.xlane.f32.xlu0 %v1520
  %v1522 = vpop.xlane.xlu0 %1521
  %v1523 = vsel %vm37, %v1513, 0.0
  %1524 = vadd.xlane.f32.xlu0 %v1523
  %v1525 = vpop.xlane.xlu0 %1524
  %v1526 = vmul.f32 %v1516, %v1214
  %v1527 = vmul.f32 %v1519, %v1214
  %v1528 = vmul.f32 %v1522, %v1214
  %v1529 = vmul.f32 %v1525, %v1214
  %v1530 = vadd.f32 %v1526, 1e-05
  %v1531 = vadd.f32 %v1527, 1e-05
  %v1532 = vadd.f32 %v1528, 1e-05
  %v1533 = vadd.f32 %v1529, 1e-05
  %v1534 = vrsqrt.pop %v1530
  %v1535 = vrsqrt.pop %v1531
  %v1536 = vrsqrt.pop %v1532
  %v1537 = vrsqrt.pop %v1533
  %v1538 = vmul.f32 %v1506, %v1534
  %v1539 = vmul.f32 %v1507, %v1535
  %v1540 = vmul.f32 %v1508, %v1536
  %v1541 = vmul.f32 %v1509, %v1537
  %v1542 = vlaneseq
  %v1543 = vshrl.u32 %v1542, 7
  %v1544 = vsub.s32 0, %v1543
  %v1545 = vrot.slane %v34, %v1544
  %v1546 = vmul.f32 %v1538, %v1545
  %v1547 = vmul.f32 %v1539, %v1545
  %v1548 = vmul.f32 %v1540, %v1545
  %v1549 = vmul.f32 %v1541, %v1545
  %v1550 = vlaneseq
  %v1551 = vshrl.u32 %v1550, 7
  %v1552 = vsub.s32 0, %v1551
  %v1553 = vrot.slane %v35, %v1552
  %v1554 = vadd.f32 %v1546, %v1553
  %v1555 = vadd.f32 %v1547, %v1553
  %v1556 = vadd.f32 %v1548, %v1553
  %v1557 = vadd.f32 %v1549, %v1553
  %1558 = vst.msk [vmem:[%s7] sm:$0xff] %vm37, %v1554
  %1559 = vst.msk [vmem:[%s7 + $0x8] sm:$0xff] %vm37, %v1555
  %1560 = vst.msk [vmem:[%s7 + $0x10] sm:$0xff] %vm37, %v1556
  %1561 = vst.msk [vmem:[%s7 + $0x18] sm:$0xff] %vm37, %v1557
  // Predicated region
  $region30: #{tpu_custom_call.1} parent=0 // pred_check
    _
  $region31: #{tpu_custom_call.1} parent=0 // pred_check_branch
    %1563 = sbr.rel (0) target = $region33
  $region32: #{tpu_custom_call.1} parent=0 // pred_region
    _
  $region33: #{tpu_custom_call.1} parent=0 // pred_fallthru
    _
  // Predicated region
  $region34: #{tpu_custom_call.1} parent=0 // pred_check
    _
  $region35: #{tpu_custom_call.1} parent=0 // pred_check_branch
    %1565 = sbr.rel (0) target = $region37
  $region36: #{tpu_custom_call.1} parent=0 // pred_region
    _
  $region37: #{tpu_custom_call.1} parent=0 // pred_fallthru
    _

</llo_original>
